<compile_context>
chip_gen: v5e
topology: v5e:2x2
jax: 0.10.0
libtpu: 0.0.40
codegen_flags: <defaults>
</compile_context>

<pallas_src>
import jax
import jax.numpy as jnp
import numpy as np
from jax.experimental import pallas as pl
from jax.experimental.pallas import tpu as pltpu

FP8_E4M3_MAX = 448.0  # max finite value of float8_e4m3fn


# --------------------------------------------------------------------------- #
# Kernel bodies
# --------------------------------------------------------------------------- #
def _act_quant_kernel(inv_scale_ref, x_ref, q_ref):
    """Static per-tensor activation quant: q = clamp(x * (1/scale), +-448).to(fp8)."""
    inv_s = inv_scale_ref[0]  # SMEM scalar (reciprocal precomputed once)
    q = jnp.clip(x_ref[...].astype(jnp.float32) * inv_s,
                 -FP8_E4M3_MAX, FP8_E4M3_MAX)
    q_ref[...] = q.astype(jnp.float8_e4m3fn)


def _w8a8_matmul_kernel(scale_ref, x_ref, w_ref, b_ref, o_ref, acc_ref):
    """SPLIT path matmul.  Grid = (M/tm, N/tn, K/tk); K (reduction) last/arbitrary.

    x_ref / w_ref hold fp8 values.  fp8 -> bf16 widening is lossless, so the
    bf16 MXU matmul matches an f32 matmul of the same fp8 values while running
    at full bf16 rate; accumulation stays f32.
    """
    k = pl.program_id(2)

    @pl.when(k == 0)
    def _():
        acc_ref[...] = jnp.zeros_like(acc_ref)

    acc_ref[...] += jnp.dot(
        x_ref[...].astype(jnp.bfloat16),
        w_ref[...].astype(jnp.bfloat16),
        preferred_element_type=jnp.float32,
    )

    @pl.when(k == pl.num_programs(2) - 1)
    def _():
        # scale_ref[0] = input_scale * weight_scale (folded on the host).
        out = (acc_ref[...] * scale_ref[0]).astype(o_ref.dtype)
        o_ref[...] = out + b_ref[...].astype(o_ref.dtype)  # bias add in out dtype (torch semantics)


def _fused_w8a8_kernel(scales_ref, x_ref, w_ref, b_ref, o_ref, acc_ref):
    """FUSED path: static act quant + fp8 matmul in one kernel (no fp8 HBM round trip).

    scales_ref[0] = 1/input_scale, scales_ref[1] = input_scale*weight_scale (SMEM).
    """
    k = pl.program_id(2)

    @pl.when(k == 0)
    def _():
        acc_ref[...] = jnp.zeros_like(acc_ref)

    q = jnp.clip(x_ref[...].astype(jnp.float32) * scales_ref[0],
                 -FP8_E4M3_MAX, FP8_E4M3_MAX)
    q = q.astype(jnp.float8_e4m3fn).astype(jnp.bfloat16)   # lossless widen to bf16
    acc_ref[...] += jnp.dot(
        q, w_ref[...].astype(jnp.bfloat16),
        preferred_element_type=jnp.float32,
    )

    @pl.when(k == pl.num_programs(2) - 1)
    def _():
        out = (acc_ref[...] * scales_ref[1]).astype(o_ref.dtype)
        o_ref[...] = out + b_ref[...].astype(o_ref.dtype)


# --------------------------------------------------------------------------- #
# Host wrapper
# --------------------------------------------------------------------------- #
def static_w8a8_fp8_linear(x, weight_fp8, bias, input_scale, weight_scale,
                           *, tm=256, tn=256, tk=512, tmq=256,
                           vmem_limit_bytes=48 * 1024 * 1024):
    """x: (..., K) bf16/f32; weight_fp8: (K, N) float8_e4m3fn (post-`patch()` layout);
    bias: (N,) or None."""
    orig_shape = x.shape
    K = x.shape[-1]
    N = weight_fp8.shape[1]
    m = x.reshape(-1, K)
    M = m.shape[0]

    tm = min(tm, M)
    tn = min(tn, N)
    tk = min(tk, K)
    tmq = min(tmq, M)
    assert M % tm == 0 and N % tn == 0 and K % tk == 0 and M % tmq == 0

    input_scale = jnp.asarray(input_scale, jnp.float32).reshape(())
    weight_scale = jnp.asarray(weight_scale, jnp.float32).reshape(())
    inv_in_scale = (1.0 / input_scale).reshape(1)            # scalar reciprocal, once
    out_scale = (input_scale * weight_scale).reshape(1)      # folded dequant scale

    if bias is None:
        bias = jnp.zeros((N,), dtype=x.dtype)
    b2d = bias.reshape(1, N)

    x_bytes = jnp.dtype(x.dtype).itemsize
    b_bytes = jnp.dtype(bias.dtype).itemsize

    n_tiles = N // tn
    grid = (M // tm, n_tiles, K // tk)
    mm_compiler_params = pltpu.CompilerParams(
        dimension_semantics=("parallel", "parallel", "arbitrary"),
        vmem_limit_bytes=vmem_limit_bytes)

    if n_tiles <= 2:
        # ---- FUSED path: quant + matmul in one kernel ------------------------
        scales = jnp.concatenate([inv_in_scale, out_scale])   # (2,) -> SMEM
        out = pl.pallas_call(
            _fused_w8a8_kernel,
            out_shape=jax.ShapeDtypeStruct((M, N), x.dtype),
            grid_spec=pltpu.PrefetchScalarGridSpec(
                num_scalar_prefetch=1,
                grid=grid,
                in_specs=[
                    pl.BlockSpec((tm, tk), lambda i, j, k, s: (i, k)),   # activations (x.dtype)
                    pl.BlockSpec((tk, tn), lambda i, j, k, s: (k, j)),   # weight (fp8, no HBM copy)
                    pl.BlockSpec((1, tn), lambda i, j, k, s: (0, j)),    # bias
                ],
                out_specs=pl.BlockSpec((tm, tn), lambda i, j, k, s: (i, j)),
                scratch_shapes=[pltpu.VMEM((tm, tn), jnp.float32)],
            ),
            compiler_params=mm_compiler_params,
            cost_estimate=pl.CostEstimate(
                flops=2 * M * N * K, transcendentals=0,
                bytes_accessed=(n_tiles * M * K * x_bytes + K * N
                                + M * N * x_bytes + N * b_bytes)),
        )(scales, m, weight_fp8, b2d)
        return out.reshape(*orig_shape[:-1], N)

    # ---- SPLIT path ----------------------------------------------------------
    # kernel 1: quantize activations once (hoisted out of the N/tn loop)
    xq = pl.pallas_call(
        _act_quant_kernel,
        out_shape=jax.ShapeDtypeStruct((M, K), jnp.float8_e4m3fn),
        grid_spec=pltpu.PrefetchScalarGridSpec(
            num_scalar_prefetch=1,                       # inv_in_scale -> SMEM
            grid=(M // tmq,),
            in_specs=[pl.BlockSpec((tmq, K), lambda i, s: (i, 0))],
            out_specs=pl.BlockSpec((tmq, K), lambda i, s: (i, 0)),
        ),
        compiler_params=pltpu.CompilerParams(
            dimension_semantics=("parallel",),
            vmem_limit_bytes=vmem_limit_bytes),
        cost_estimate=pl.CostEstimate(
            flops=2 * M * K, transcendentals=0,
            bytes_accessed=M * K * x_bytes + M * K),
    )(inv_in_scale, m)

    # kernel 2: fp8 W8A8 matmul on the MXU (bf16 operands, f32 accumulate)
    out = pl.pallas_call(
        _w8a8_matmul_kernel,
        out_shape=jax.ShapeDtypeStruct((M, N), x.dtype),
        grid_spec=pltpu.PrefetchScalarGridSpec(
            num_scalar_prefetch=1,                       # out_scale -> SMEM
            grid=grid,
            in_specs=[
                pl.BlockSpec((tm, tk), lambda i, j, k, s: (i, k)),   # activations (fp8)
                pl.BlockSpec((tk, tn), lambda i, j, k, s: (k, j)),   # weight (fp8)
                pl.BlockSpec((1, tn), lambda i, j, k, s: (0, j)),    # bias
            ],
            out_specs=pl.BlockSpec((tm, tn), lambda i, j, k, s: (i, j)),
            scratch_shapes=[pltpu.VMEM((tm, tn), jnp.float32)],
        ),
        compiler_params=mm_compiler_params,
        cost_estimate=pl.CostEstimate(
            flops=2 * M * N * K, transcendentals=0,
            bytes_accessed=n_tiles * M * K + K * N + M * N * x_bytes + N * b_bytes),
    )(out_scale, xq, weight_fp8, b2d)

    return out.reshape(*orig_shape[:-1], N)


# --------------------------------------------------------------------------- #
# Pure-JAX reference mirroring torch_forward
# --------------------------------------------------------------------------- #
def _reference(x, weight_fp8, bias, input_scale, weight_scale):
    K = x.shape[-1]
    m = x.reshape(-1, K).astype(jnp.float32)
    q = jnp.clip(m / input_scale, -FP8_E4M3_MAX, FP8_E4M3_MAX)
    q = q.astype(jnp.float8_e4m3fn).astype(jnp.float32)
    out = jnp.dot(q, weight_fp8.astype(jnp.float32),
                  precision=jax.lax.Precision.HIGHEST)
    out = (out * (input_scale * weight_scale)).astype(x.dtype)
    out = out + bias.astype(x.dtype)
    return out.reshape(*x.shape[:-1], -1)


def _run_case(key, batch, seq, in_features, out_features):
    kx, kw, kb = jax.random.split(key, 3)
    x = jax.random.normal(kx, (batch, seq, in_features), dtype=jnp.float32)
    x = x.astype(jnp.bfloat16)

    # Deterministic synthetic parameters (module stores weight as float8_e4m3fn).
    weight_fp8 = jax.random.normal(
        kw, (in_features, out_features), dtype=jnp.float32
    ).astype(jnp.float8_e4m3fn)                       # (K, N), post-patch layout
    bias = (0.1 * jax.random.normal(kb, (out_features,), dtype=jnp.float32)
            ).astype(jnp.bfloat16)
    input_scale = jnp.float32(0.02)
    weight_scale = jnp.float32(0.015)

    out = static_w8a8_fp8_linear(x, weight_fp8, bias, input_scale, weight_scale)
    out = jax.block_until_ready(out)

    ref = _reference(x, weight_fp8, bias, input_scale, weight_scale)
    assert out.shape == (batch, seq, out_features)
    assert out.dtype == x.dtype
    np.testing.assert_allclose(np.asarray(out, np.float32),
                               np.asarray(ref, np.float32),
                               rtol=5e-2, atol=5e-2)


if __name__ == "__main__":
    key = jax.random.PRNGKey(0)
    k1, k2 = jax.random.split(key)

    # Small shapes consistent with the module: batch=2, seq=8, in=128, out=256.
    # N/tn == 1 -> exercises the FUSED quant+matmul path.
    _run_case(k1, batch=2, seq=8, in_features=128, out_features=256)

    # Wider N (N/tn == 4) -> exercises the SPLIT path (standalone fp8 quant kernel).
    _run_case(k2, batch=2, seq=8, in_features=256, out_features=1024)

    print("KERNEL_OK")
</pallas_src>

<mosaic_0001>
module attributes {stable_mosaic.version = 11 : i64} {
  func.func @_fused_w8a8_kernel(%arg0: i32, %arg1: i32, %arg2: i32, %arg3: memref<2xf32, #tpu.memory_space<smem>>, %arg4: memref<16x128xbf16, #tpu.memory_space<vmem>>, %arg5: memref<128x256xf8E4M3FN, #tpu.memory_space<vmem>>, %arg6: memref<1x256xbf16, #tpu.memory_space<vmem>>, %arg7: memref<16x256xbf16, #tpu.memory_space<vmem>>, %arg8: memref<16x256xf32, #tpu.memory_space<vmem>>) attributes {dimension_semantics = [#tpu.dimension_semantics<parallel>, #tpu.dimension_semantics<parallel>, #tpu.dimension_semantics<arbitrary>], iteration_bounds = array<i64: 1, 1, 1>, scalar_prefetch = 1 : i64, scratch_operands = 1 : i64, tpu.core_type = #tpu.core_type<tc>, window_params = [{transform_indices = @transform_0, window_bounds = array<i64: 16, 128>}, {transform_indices = @transform_1, window_bounds = array<i64: 128, 256>}, {transform_indices = @transform_2, window_bounds = array<i64: 1, 256>}, {transform_indices = @transform_3, window_bounds = array<i64: 16, 256>}]} {
    %c0_i32 = arith.constant 0 : i32
    %0 = arith.cmpi eq, %arg2, %c0_i32 : i32
    %1 = arith.extui %0 : i1 to i32
    %c0_i32_0 = arith.constant 0 : i32
    %2 = arith.cmpi ne, %1, %c0_i32_0 : i32
    scf.if %2 {
      %cst_13 = arith.constant 0.000000e+00 : f32
      %23 = vector.broadcast %cst_13 : f32 to vector<16x256xf32>
      %c0_14 = arith.constant 0 : index
      %c0_15 = arith.constant 0 : index
      %24 = vector.load %arg8[%c0_14, %c0_15] : memref<16x256xf32, #tpu.memory_space<vmem>>, vector<16x256xf32>
      tpu.vector_store %arg8[%c0_14, %c0_15], %23 {strides = array<i32>} : memref<16x256xf32, #tpu.memory_space<vmem>>, vector<16x256xf32>,
    } else {
    }
    %c0 = arith.constant 0 : index
    %c0_1 = arith.constant 0 : index
    %3 = vector.load %arg4[%c0, %c0_1] : memref<16x128xbf16, #tpu.memory_space<vmem>>, vector<16x128xbf16>
    %4 = arith.extf %3 : vector<16x128xbf16> to vector<16x128xf32>
    %c0_2 = arith.constant 0 : index
    %5 = memref.load %arg3[%c0_2] : memref<2xf32, #tpu.memory_space<smem>>
    %6 = vector.broadcast %5 : f32 to vector<16x128xf32>
    %7 = arith.mulf %4, %6 : vector<16x128xf32>
    %cst = arith.constant -4.480000e+02 : f32
    %cst_3 = arith.constant 4.480000e+02 : f32
    %8 = vector.broadcast %cst : f32 to vector<16x128xf32>
    %9 = arith.maximumf %8, %7 : vector<16x128xf32>
    %10 = vector.broadcast %cst_3 : f32 to vector<16x128xf32>
    %11 = arith.minimumf %10, %9 : vector<16x128xf32>
    %12 = arith.truncf %11 : vector<16x128xf32> to vector<16x128xf8E4M3FN>
    %13 = arith.extf %12 : vector<16x128xf8E4M3FN> to vector<16x128xbf16>
    %c0_4 = arith.constant 0 : index
    %c0_5 = arith.constant 0 : index
    %14 = vector.load %arg8[%c0_4, %c0_5] : memref<16x256xf32, #tpu.memory_space<vmem>>, vector<16x256xf32>
    %c0_6 = arith.constant 0 : index
    %c0_7 = arith.constant 0 : index
    %15 = vector.load %arg5[%c0_6, %c0_7] : memref<128x256xf8E4M3FN, #tpu.memory_space<vmem>>, vector<128x256xf8E4M3FN>
    %16 = arith.extf %15 : vector<128x256xf8E4M3FN> to vector<128x256xbf16>
    %cst_8 = arith.constant dense<0.000000e+00> : vector<16x256xf32>
    %17 = tpu.matmul %13, %16, %cst_8 {dimension_numbers = #tpu.dot_dimension_numbers<[1], [0], [0], [1], [0, 0, 1, 1], [], []>} : vector<16x128xbf16>, vector<128x256xbf16>, vector<16x256xf32> -> vector<16x256xf32>
    %18 = arith.addf %14, %17 : vector<16x256xf32>
    %c0_9 = arith.constant 0 : index
    %c0_10 = arith.constant 0 : index
    %19 = vector.load %arg8[%c0_9, %c0_10] : memref<16x256xf32, #tpu.memory_space<vmem>>, vector<16x256xf32>
    tpu.vector_store %arg8[%c0_9, %c0_10], %18 {strides = array<i32>} : memref<16x256xf32, #tpu.memory_space<vmem>>, vector<16x256xf32>,
    %c0_i32_11 = arith.constant 0 : i32
    %20 = arith.cmpi eq, %arg2, %c0_i32_11 : i32
    %21 = arith.extui %20 : i1 to i32
    %c0_i32_12 = arith.constant 0 : i32
    %22 = arith.cmpi ne, %21, %c0_i32_12 : i32
    scf.if %22 {
      %c0_13 = arith.constant 0 : index
      %c0_14 = arith.constant 0 : index
      %23 = vector.load %arg8[%c0_13, %c0_14] : memref<16x256xf32, #tpu.memory_space<vmem>>, vector<16x256xf32>
      %c1 = arith.constant 1 : index
      %24 = memref.load %arg3[%c1] : memref<2xf32, #tpu.memory_space<smem>>
      %25 = vector.broadcast %24 : f32 to vector<16x256xf32>
      %26 = arith.mulf %23, %25 : vector<16x256xf32>
      %27 = arith.truncf %26 : vector<16x256xf32> to vector<16x256xbf16>
      %c0_15 = arith.constant 0 : index
      %c0_16 = arith.constant 0 : index
      %28 = vector.load %arg6[%c0_15, %c0_16] : memref<1x256xbf16, #tpu.memory_space<vmem>>, vector<1x256xbf16>
      %29 = vector.broadcast %28 : vector<1x256xbf16> to vector<16x256xbf16>
      %30 = arith.addf %27, %29 : vector<16x256xbf16>
      %c0_17 = arith.constant 0 : index
      %c0_18 = arith.constant 0 : index
      %31 = vector.load %arg7[%c0_17, %c0_18] : memref<16x256xbf16, #tpu.memory_space<vmem>>, vector<16x256xbf16>
      tpu.vector_store %arg7[%c0_17, %c0_18], %30 {strides = array<i32>} : memref<16x256xbf16, #tpu.memory_space<vmem>>, vector<16x256xbf16>,
    } else {
    }
    return
  }
  func.func @transform_0(%arg0: i32, %arg1: i32, %arg2: i32, %arg3: memref<2xf32, #tpu.memory_space<smem>>) -> (i32, i32) {
    %c0_i32 = arith.constant 0 : i32
    return %arg0, %arg2 : i32, i32
  }
  func.func @transform_1(%arg0: i32, %arg1: i32, %arg2: i32, %arg3: memref<2xf32, #tpu.memory_space<smem>>) -> (i32, i32) {
    %c0_i32 = arith.constant 0 : i32
    return %arg2, %arg1 : i32, i32
  }
  func.func @transform_2(%arg0: i32, %arg1: i32, %arg2: i32, %arg3: memref<2xf32, #tpu.memory_space<smem>>) -> (i32, i32) {
    %c0_i32 = arith.constant 0 : i32
    %c0_i32_0 = arith.constant 0 : i32
    return %c0_i32, %arg1 : i32, i32
  }
  func.func @transform_3(%arg0: i32, %arg1: i32, %arg2: i32, %arg3: memref<2xf32, #tpu.memory_space<smem>>) -> (i32, i32) {
    %c0_i32 = arith.constant 0 : i32
    return %arg0, %arg1 : i32, i32
  }
}

</mosaic_0001>

<llo_original>
// kernel: tpu_custom_call.1
$region0: #{tpu_custom_call.1}
  #allocation0 [shape = 'u32[]', space=smem, size = 0x4, offset = 0x4, fixed_abs, tag = 'smem constant byte address 0x4 - core index']
  #allocation1 [shape = 'u32[72,128]{1,0:T(1,128)}', space=vmem, size = 0x9000, scoped, tag = 'internal scratch']
  #allocation2 [shape = 'f32[16,256]{1,0:T(8,128)}', space=vmem, size = 0x4000, scoped, tag = 'scratch operand']
  #allocation3 [shape = 's32[1]{0}', space=sflag, size = 0x4, scoped, tag = 'scoped memory for tpu_custom_call.1']
  #allocation4 [shape = 'u8[512]{0}', space=smem, size = 0x200, scoped, tag = 'prefetched SMEM operand 0']
  %s0 = inlined_call_operand.hbm [shape: f32[2], index: 0, kind: input, shape index: {}]
  %s1 = inlined_call_operand.hbm [shape: bf16[16,128], index: 1, kind: input, shape index: {}]
  %s2 = inlined_call_operand.hbm [shape: f8e4m3fn[128,256], index: 2, kind: input, shape index: {}]
  %s3 = inlined_call_operand.vmem [shape: bf16[1,256], index: 3, kind: input, shape index: {}]
  %s4 = inlined_call_operand.hbm [shape: bf16[16,256], index: 4, kind: output, shape index: {}]
  %s5 = sld [smem:[#allocation0]]
  $region72: #{tpu_custom_call.1} parent=0
    _
  %s7 = ssub.s32 1, %s5
  %s8 = scalar_select 0, %s7, %s5
  %s10 = sshll.u32 %s0, 4
  %s11 = int_to_ptr.hbm [resolvable:$true] %s10
  %13 = dma.hbm_to_smem %s11, 16, [#allocation4], [#allocation3]
  %15 = dma.done [#allocation3], 16
  %16 = sfence
  $region1: #{tpu_custom_call.1} parent=0
    #allocation5 [shape = 'u8[4096]{0}', space=vmem, size = 0x1000, scoped, tag = 'input window, operand 1, single buffered']
    #allocation6 [shape = 's32[1]{0}', space=sflag, size = 0x4, scoped, tag = 'scoped memory for tpu_custom_call.1']
    #allocation7 [shape = 's32[1]{0}', space=sflag, size = 0x4, scoped, tag = 'scoped memory for tpu_custom_call.1']
    #allocation8 [shape = 'u8[32768]{0}', space=vmem, size = 0x8000, scoped, tag = 'input window, operand 2, single buffered']
    #allocation9 [shape = 's32[1]{0}', space=sflag, size = 0x4, scoped, tag = 'scoped memory for tpu_custom_call.1']
    #allocation10 [shape = 'u8[8192]{0}', space=vmem, size = 0x2000, scoped, tag = 'output window, operand 0, single buffered']
    %17 = vsyncpa [#allocation6], 0
    %18 = vsyncpa [#allocation9], 0
    %19 = vsyncpa [#allocation7], 0
    // Predicated region
    $region2: #{tpu_custom_call.1} parent=1 // pred_check
      _
    $region3: #{tpu_custom_call.1} parent=1 // pred_check_branch
      %21 = sbr.rel (0) target = $region5
    $region4: #{tpu_custom_call.1} parent=1 // pred_region
      %23 = vsyncadd [#allocation6], 0
      %s24 = sshll.u32 %s1, 4
      %s25 = int_to_ptr.hbm [resolvable:$true] %s24
      %s26 = sshll.u32 [#allocation5], 4
      %s27 = int_to_ptr.vmem [resolvable:$true] %s26
      %32 = dma.hbm_to_vmem [thread:$0]  %s25, 128, %s27, [#allocation6], 64, 64, 4
    $region5: #{tpu_custom_call.1} parent=1 // pred_fallthru
      _
    // Predicated region
    $region6: #{tpu_custom_call.1} parent=1 // pred_check
      _
    $region7: #{tpu_custom_call.1} parent=1 // pred_check_branch
      %34 = sbr.rel (0) target = $region9
    $region8: #{tpu_custom_call.1} parent=1 // pred_region
      %36 = vsyncadd [#allocation9], 0
      %s37 = sshll.u32 %s2, 4
      %s38 = int_to_ptr.hbm [resolvable:$true] %s37
      %s39 = sshll.u32 [#allocation8], 4
      %s40 = int_to_ptr.vmem [resolvable:$true] %s39
      %45 = dma.hbm_to_vmem [thread:$0]  %s38, 1024, %s40, [#allocation9], 256, 256, 16
    $region9: #{tpu_custom_call.1} parent=1 // pred_fallthru
      _
    // Predicated region
    $region10: #{tpu_custom_call.1} parent=1 // pred_check
      _
    $region11: #{tpu_custom_call.1} parent=1 // pred_check_branch
      %47 = sbr.rel (0) target = $region13
    $region12: #{tpu_custom_call.1} parent=1 // pred_region
      _
    $region13: #{tpu_custom_call.1} parent=1 // pred_fallthru
      _
    // Predicated region
    $region14: #{tpu_custom_call.1} parent=1 // pred_check
      _
    $region15: #{tpu_custom_call.1} parent=1 // pred_check_branch
      %49 = sbr.rel (0) target = $region17
    $region16: #{tpu_custom_call.1} parent=1 // pred_region
      %51 = dma.done [#allocation6], 128
    $region17: #{tpu_custom_call.1} parent=1 // pred_fallthru
      _
    // Predicated region
    $region18: #{tpu_custom_call.1} parent=1 // pred_check
      _
    $region19: #{tpu_custom_call.1} parent=1 // pred_check_branch
      %53 = sbr.rel (0) target = $region21
    $region20: #{tpu_custom_call.1} parent=1 // pred_region
      %55 = dma.done [#allocation9], 1024
    $region21: #{tpu_custom_call.1} parent=1 // pred_fallthru
      _
    %p56 = scmp.eq.s32.totalorder 0, 0
    // Predicated region
    $region22: #{tpu_custom_call.1} parent=1 // pred_check
      %p57 = pneg %p56
    $region23: #{tpu_custom_call.1} parent=1 // pred_check_branch
      %59 = sbr.rel (%p57) target = $region25
    $region24: #{tpu_custom_call.1} parent=1 // pred_region
      %60 = vst [vmem:[#allocation2] sm:$0xff] 0.0
      %61 = vst [vmem:[#allocation2 + $0x8] sm:$0xff] 0.0
      %62 = vst [vmem:[#allocation2 + $0x10] sm:$0xff] 0.0
      %63 = vst [vmem:[#allocation2 + $0x18] sm:$0xff] 0.0
    $region25: #{tpu_custom_call.1} parent=1 // pred_fallthru
      _
    %v64 = vld [vmem:[#allocation5] sm:$0xf]
    %v65 = vld [vmem:[#allocation5 + $0x4] sm:$0xf]
    %v66 = vunpack.c.l.bf16 %v64
    %v67 = vunpack.c.l.bf16 %v65
    %s68 = sld [smem:[#allocation4]]
    %v69 = vstv %s68
    %v70 = vmul.f32 %v66, %v69
    %v71 = vmul.f32 %v67, %v69
    %v72 = vmax.f32 %v70, -448.0
    %v73 = vmax.f32 %v71, -448.0
    %v74 = vmin.f32 %v72, 448.0
    %v75 = vmin.f32 %v73, 448.0
    %v76 = vand.u32 2147483647, %v74
    %v77 = vmul.f32 %v74, 0.0625
    %v78 = vcvt.f32.f8e4m3b11 %v77
    %vm79 = vweird.f32 %v74
    %v80 = vsel %vm79, 127, %v78
    %v81 = vshrl.u32 %v74, 24
    %v82 = vand.u32 %v81, 128
    %vm83 = vcmp.le.f32.partialorder %v76, 0.0009765625
    %v84 = vsel %vm83, %v82, %v80
    %v85 = vand.u32 2147483647, %v75
    %v86 = vmul.f32 %v75, 0.0625
    %v87 = vcvt.f32.f8e4m3b11 %v86
    %vm88 = vweird.f32 %v75
    %v89 = vsel %vm88, 127, %v87
    %v90 = vshrl.u32 %v75, 24
    %v91 = vand.u32 %v90, 128
    %vm92 = vcmp.le.f32.partialorder %v85, 0.0009765625
    %v93 = vsel %vm92, %v91, %v89
    %v94 = vpack.c.b16 %v93, %v84
    %v95 = vpack.c.b8 %v94, %v94
    $region26: #{tpu_custom_call.1} parent=1
      #allocation11 [shape = 'u8[4096]{0}', space=vmem, size = 0x1000, scoped, tag = 'scoped memory for tpu_custom_call.1']
      %97 = vst [vmem:[#allocation11] sm:$0xff] %v95
      %v98 = vld [vmem:[#allocation11] sm:$0x3]
      %v99 = vunpack.c.0.f8e4m3b11 %v98
      %v100 = vunpack.c.1.f8e4m3b11 %v98
      %v101 = vunpack.c.2.f8e4m3b11 %v98
      %v102 = vunpack.c.3.f8e4m3b11 %v98
      %v103 = vand.u32 2147483647, %v99
      %vm104 = vcmp.gt.f32.partialorder %v103, 29.0
      %vm105 = vcmp.ne.f32.partialorder %v99, %v99
      %v106 = vmul.f32 %v99, 16.0
      %v107 = vsel %vm105, -0.0, %v106
      %v108 = vsel %vm104, nan, %v107
      %v109 = vand.u32 2147483647, %v100
      %vm110 = vcmp.gt.f32.partialorder %v109, 29.0
      %vm111 = vcmp.ne.f32.partialorder %v100, %v100
      %v112 = vmul.f32 %v100, 16.0
      %v113 = vsel %vm111, -0.0, %v112
      %v114 = vsel %vm110, nan, %v113
      %v115 = vand.u32 2147483647, %v101
      %vm116 = vcmp.gt.f32.partialorder %v115, 29.0
      %vm117 = vcmp.ne.f32.partialorder %v101, %v101
      %v118 = vmul.f32 %v101, 16.0
      %v119 = vsel %vm117, -0.0, %v118
      %v120 = vsel %vm116, nan, %v119
      %v121 = vand.u32 2147483647, %v102
      %vm122 = vcmp.gt.f32.partialorder %v121, 29.0
      %vm123 = vcmp.ne.f32.partialorder %v102, %v102
      %v124 = vmul.f32 %v102, 16.0
      %v125 = vsel %vm123, -0.0, %v124
      %v126 = vsel %vm122, nan, %v125
    $region27: #{tpu_custom_call.1} parent=1
      #allocation12 [shape = 'u8[4096]{0}', space=vmem, size = 0x1000, scoped, tag = 'scoped memory for tpu_custom_call.1']
      %127 = vst [vmem:[#allocation12] sm:$0xff] %v95
      %s128 = scalar_lea.vmem [#allocation12], 2
      %v129 = vld [vmem:[%s128] sm:$0x3]
      %v130 = vunpack.c.0.f8e4m3b11 %v129
      %v131 = vunpack.c.1.f8e4m3b11 %v129
      %v132 = vunpack.c.2.f8e4m3b11 %v129
      %v133 = vunpack.c.3.f8e4m3b11 %v129
      %v134 = vand.u32 2147483647, %v130
      %vm135 = vcmp.gt.f32.partialorder %v134, 29.0
      %vm136 = vcmp.ne.f32.partialorder %v130, %v130
      %v137 = vmul.f32 %v130, 16.0
      %v138 = vsel %vm136, -0.0, %v137
      %v139 = vsel %vm135, nan, %v138
      %v140 = vand.u32 2147483647, %v131
      %vm141 = vcmp.gt.f32.partialorder %v140, 29.0
      %vm142 = vcmp.ne.f32.partialorder %v131, %v131
      %v143 = vmul.f32 %v131, 16.0
      %v144 = vsel %vm142, -0.0, %v143
      %v145 = vsel %vm141, nan, %v144
      %v146 = vand.u32 2147483647, %v132
      %vm147 = vcmp.gt.f32.partialorder %v146, 29.0
      %vm148 = vcmp.ne.f32.partialorder %v132, %v132
      %v149 = vmul.f32 %v132, 16.0
      %v150 = vsel %vm148, -0.0, %v149
      %v151 = vsel %vm147, nan, %v150
      %v152 = vand.u32 2147483647, %v133
      %vm153 = vcmp.gt.f32.partialorder %v152, 29.0
      %vm154 = vcmp.ne.f32.partialorder %v133, %v133
      %v155 = vmul.f32 %v133, 16.0
      %v156 = vsel %vm154, -0.0, %v155
      %v157 = vsel %vm153, nan, %v156
    %v158 = vpack.c.bf16 %v139, %v108
    %v159 = vld [vmem:[#allocation2] sm:$0xff]
    %v160 = vld [vmem:[#allocation2 + $0x8] sm:$0xff]
    %v161 = vld [vmem:[#allocation2 + $0x10] sm:$0xff]
    %v162 = vld [vmem:[#allocation2 + $0x18] sm:$0xff]
    %v163 = vld [vmem:[#allocation8] sm:$0xff]
    %v164 = vld [vmem:[#allocation8 + $0x8] sm:$0xff]
    %v165 = vld [vmem:[#allocation8 + $0x10] sm:$0xff]
    %v166 = vld [vmem:[#allocation8 + $0x18] sm:$0xff]
    %v167 = vld [vmem:[#allocation8 + $0x20] sm:$0xff]
    %v168 = vld [vmem:[#allocation8 + $0x28] sm:$0xff]
    %v169 = vld [vmem:[#allocation8 + $0x30] sm:$0xff]
    %v170 = vld [vmem:[#allocation8 + $0x38] sm:$0xff]
    $region28: #{tpu_custom_call.1} parent=1
      #allocation13 [shape = 'u8[4096]{0}', space=vmem, size = 0x1000, scoped, tag = 'scoped memory for tpu_custom_call.1']
      %171 = vst [vmem:[#allocation13] sm:$0xff] %v163
      %v172 = vld [vmem:[#allocation13] sm:$0x3]
      %v173 = vunpack.c.0.f8e4m3b11 %v172
      %v174 = vunpack.c.1.f8e4m3b11 %v172
      %v175 = vunpack.c.2.f8e4m3b11 %v172
      %v176 = vunpack.c.3.f8e4m3b11 %v172
      %v177 = vand.u32 2147483647, %v173
      %vm178 = vcmp.gt.f32.partialorder %v177, 29.0
      %vm179 = vcmp.ne.f32.partialorder %v173, %v173
      %v180 = vmul.f32 %v173, 16.0
      %v181 = vsel %vm179, -0.0, %v180
      %v182 = vsel %vm178, nan, %v181
      %v183 = vand.u32 2147483647, %v174
      %vm184 = vcmp.gt.f32.partialorder %v183, 29.0
      %vm185 = vcmp.ne.f32.partialorder %v174, %v174
      %v186 = vmul.f32 %v174, 16.0
      %v187 = vsel %vm185, -0.0, %v186
      %v188 = vsel %vm184, nan, %v187
      %v189 = vand.u32 2147483647, %v175
      %vm190 = vcmp.gt.f32.partialorder %v189, 29.0
      %vm191 = vcmp.ne.f32.partialorder %v175, %v175
      %v192 = vmul.f32 %v175, 16.0
      %v193 = vsel %vm191, -0.0, %v192
      %v194 = vsel %vm190, nan, %v193
      %v195 = vand.u32 2147483647, %v176
      %vm196 = vcmp.gt.f32.partialorder %v195, 29.0
      %vm197 = vcmp.ne.f32.partialorder %v176, %v176
      %v198 = vmul.f32 %v176, 16.0
      %v199 = vsel %vm197, -0.0, %v198
      %v200 = vsel %vm196, nan, %v199
    $region29: #{tpu_custom_call.1} parent=1
      #allocation14 [shape = 'u8[4096]{0}', space=vmem, size = 0x1000, scoped, tag = 'scoped memory for tpu_custom_call.1']
      %201 = vst [vmem:[#allocation14] sm:$0xff] %v164
      %v202 = vld [vmem:[#allocation14] sm:$0x3]
      %v203 = vunpack.c.0.f8e4m3b11 %v202
      %v204 = vunpack.c.1.f8e4m3b11 %v202
      %v205 = vunpack.c.2.f8e4m3b11 %v202
      %v206 = vunpack.c.3.f8e4m3b11 %v202
      %v207 = vand.u32 2147483647, %v203
      %vm208 = vcmp.gt.f32.partialorder %v207, 29.0
      %vm209 = vcmp.ne.f32.partialorder %v203, %v203
      %v210 = vmul.f32 %v203, 16.0
      %v211 = vsel %vm209, -0.0, %v210
      %v212 = vsel %vm208, nan, %v211
      %v213 = vand.u32 2147483647, %v204
      %vm214 = vcmp.gt.f32.partialorder %v213, 29.0
      %vm215 = vcmp.ne.f32.partialorder %v204, %v204
      %v216 = vmul.f32 %v204, 16.0
      %v217 = vsel %vm215, -0.0, %v216
      %v218 = vsel %vm214, nan, %v217
      %v219 = vand.u32 2147483647, %v205
      %vm220 = vcmp.gt.f32.partialorder %v219, 29.0
      %vm221 = vcmp.ne.f32.partialorder %v205, %v205
      %v222 = vmul.f32 %v205, 16.0
      %v223 = vsel %vm221, -0.0, %v222
      %v224 = vsel %vm220, nan, %v223
      %v225 = vand.u32 2147483647, %v206
      %vm226 = vcmp.gt.f32.partialorder %v225, 29.0
      %vm227 = vcmp.ne.f32.partialorder %v206, %v206
      %v228 = vmul.f32 %v206, 16.0
      %v229 = vsel %vm227, -0.0, %v228
      %v230 = vsel %vm226, nan, %v229
    $region30: #{tpu_custom_call.1} parent=1
      #allocation15 [shape = 'u8[4096]{0}', space=vmem, size = 0x1000, scoped, tag = 'scoped memory for tpu_custom_call.1']
      %231 = vst [vmem:[#allocation15] sm:$0xff] %v163
      %s232 = scalar_lea.vmem [#allocation15], 2
      %v233 = vld [vmem:[%s232] sm:$0x3]
      %v234 = vunpack.c.0.f8e4m3b11 %v233
      %v235 = vunpack.c.1.f8e4m3b11 %v233
      %v236 = vunpack.c.2.f8e4m3b11 %v233
      %v237 = vunpack.c.3.f8e4m3b11 %v233
      %v238 = vand.u32 2147483647, %v234
      %vm239 = vcmp.gt.f32.partialorder %v238, 29.0
      %vm240 = vcmp.ne.f32.partialorder %v234, %v234
      %v241 = vmul.f32 %v234, 16.0
      %v242 = vsel %vm240, -0.0, %v241
      %v243 = vsel %vm239, nan, %v242
      %v244 = vand.u32 2147483647, %v235
      %vm245 = vcmp.gt.f32.partialorder %v244, 29.0
      %vm246 = vcmp.ne.f32.partialorder %v235, %v235
      %v247 = vmul.f32 %v235, 16.0
      %v248 = vsel %vm246, -0.0, %v247
      %v249 = vsel %vm245, nan, %v248
      %v250 = vand.u32 2147483647, %v236
      %vm251 = vcmp.gt.f32.partialorder %v250, 29.0
      %vm252 = vcmp.ne.f32.partialorder %v236, %v236
      %v253 = vmul.f32 %v236, 16.0
      %v254 = vsel %vm252, -0.0, %v253
      %v255 = vsel %vm251, nan, %v254
      %v256 = vand.u32 2147483647, %v237
      %vm257 = vcmp.gt.f32.partialorder %v256, 29.0
      %vm258 = vcmp.ne.f32.partialorder %v237, %v237
      %v259 = vmul.f32 %v237, 16.0
      %v260 = vsel %vm258, -0.0, %v259
      %v261 = vsel %vm257, nan, %v260
    $region31: #{tpu_custom_call.1} parent=1
      #allocation16 [shape = 'u8[4096]{0}', space=vmem, size = 0x1000, scoped, tag = 'scoped memory for tpu_custom_call.1']
      %262 = vst [vmem:[#allocation16] sm:$0xff] %v164
      %s263 = scalar_lea.vmem [#allocation16], 2
      %v264 = vld [vmem:[%s263] sm:$0x3]
      %v265 = vunpack.c.0.f8e4m3b11 %v264
      %v266 = vunpack.c.1.f8e4m3b11 %v264
      %v267 = vunpack.c.2.f8e4m3b11 %v264
      %v268 = vunpack.c.3.f8e4m3b11 %v264
      %v269 = vand.u32 2147483647, %v265
      %vm270 = vcmp.gt.f32.partialorder %v269, 29.0
      %vm271 = vcmp.ne.f32.partialorder %v265, %v265
      %v272 = vmul.f32 %v265, 16.0
      %v273 = vsel %vm271, -0.0, %v272
      %v274 = vsel %vm270, nan, %v273
      %v275 = vand.u32 2147483647, %v266
      %vm276 = vcmp.gt.f32.partialorder %v275, 29.0
      %vm277 = vcmp.ne.f32.partialorder %v266, %v266
      %v278 = vmul.f32 %v266, 16.0
      %v279 = vsel %vm277, -0.0, %v278
      %v280 = vsel %vm276, nan, %v279
      %v281 = vand.u32 2147483647, %v267
      %vm282 = vcmp.gt.f32.partialorder %v281, 29.0
      %vm283 = vcmp.ne.f32.partialorder %v267, %v267
      %v284 = vmul.f32 %v267, 16.0
      %v285 = vsel %vm283, -0.0, %v284
      %v286 = vsel %vm282, nan, %v285
      %v287 = vand.u32 2147483647, %v268
      %vm288 = vcmp.gt.f32.partialorder %v287, 29.0
      %vm289 = vcmp.ne.f32.partialorder %v268, %v268
      %v290 = vmul.f32 %v268, 16.0
      %v291 = vsel %vm289, -0.0, %v290
      %v292 = vsel %vm288, nan, %v291
    $region32: #{tpu_custom_call.1} parent=1
      #allocation17 [shape = 'u8[4096]{0}', space=vmem, size = 0x1000, scoped, tag = 'scoped memory for tpu_custom_call.1']
      %293 = vst [vmem:[#allocation17] sm:$0xff] %v163
      %s294 = scalar_lea.vmem [#allocation17], 4
      %v295 = vld [vmem:[%s294] sm:$0x3]
      %v296 = vunpack.c.0.f8e4m3b11 %v295
      %v297 = vunpack.c.1.f8e4m3b11 %v295
      %v298 = vunpack.c.2.f8e4m3b11 %v295
      %v299 = vunpack.c.3.f8e4m3b11 %v295
      %v300 = vand.u32 2147483647, %v296
      %vm301 = vcmp.gt.f32.partialorder %v300, 29.0
      %vm302 = vcmp.ne.f32.partialorder %v296, %v296
      %v303 = vmul.f32 %v296, 16.0
      %v304 = vsel %vm302, -0.0, %v303
      %v305 = vsel %vm301, nan, %v304
      %v306 = vand.u32 2147483647, %v297
      %vm307 = vcmp.gt.f32.partialorder %v306, 29.0
      %vm308 = vcmp.ne.f32.partialorder %v297, %v297
      %v309 = vmul.f32 %v297, 16.0
      %v310 = vsel %vm308, -0.0, %v309
      %v311 = vsel %vm307, nan, %v310
      %v312 = vand.u32 2147483647, %v298
      %vm313 = vcmp.gt.f32.partialorder %v312, 29.0
      %vm314 = vcmp.ne.f32.partialorder %v298, %v298
      %v315 = vmul.f32 %v298, 16.0
      %v316 = vsel %vm314, -0.0, %v315
      %v317 = vsel %vm313, nan, %v316
      %v318 = vand.u32 2147483647, %v299
      %vm319 = vcmp.gt.f32.partialorder %v318, 29.0
      %vm320 = vcmp.ne.f32.partialorder %v299, %v299
      %v321 = vmul.f32 %v299, 16.0
      %v322 = vsel %vm320, -0.0, %v321
      %v323 = vsel %vm319, nan, %v322
    $region33: #{tpu_custom_call.1} parent=1
      #allocation18 [shape = 'u8[4096]{0}', space=vmem, size = 0x1000, scoped, tag = 'scoped memory for tpu_custom_call.1']
      %324 = vst [vmem:[#allocation18] sm:$0xff] %v164
      %s325 = scalar_lea.vmem [#allocation18], 4
      %v326 = vld [vmem:[%s325] sm:$0x3]
      %v327 = vunpack.c.0.f8e4m3b11 %v326
      %v328 = vunpack.c.1.f8e4m3b11 %v326
      %v329 = vunpack.c.2.f8e4m3b11 %v326
      %v330 = vunpack.c.3.f8e4m3b11 %v326
      %v331 = vand.u32 2147483647, %v327
      %vm332 = vcmp.gt.f32.partialorder %v331, 29.0
      %vm333 = vcmp.ne.f32.partialorder %v327, %v327
      %v334 = vmul.f32 %v327, 16.0
      %v335 = vsel %vm333, -0.0, %v334
      %v336 = vsel %vm332, nan, %v335
      %v337 = vand.u32 2147483647, %v328
      %vm338 = vcmp.gt.f32.partialorder %v337, 29.0
      %vm339 = vcmp.ne.f32.partialorder %v328, %v328
      %v340 = vmul.f32 %v328, 16.0
      %v341 = vsel %vm339, -0.0, %v340
      %v342 = vsel %vm338, nan, %v341
      %v343 = vand.u32 2147483647, %v329
      %vm344 = vcmp.gt.f32.partialorder %v343, 29.0
      %vm345 = vcmp.ne.f32.partialorder %v329, %v329
      %v346 = vmul.f32 %v329, 16.0
      %v347 = vsel %vm345, -0.0, %v346
      %v348 = vsel %vm344, nan, %v347
      %v349 = vand.u32 2147483647, %v330
      %vm350 = vcmp.gt.f32.partialorder %v349, 29.0
      %vm351 = vcmp.ne.f32.partialorder %v330, %v330
      %v352 = vmul.f32 %v330, 16.0
      %v353 = vsel %vm351, -0.0, %v352
      %v354 = vsel %vm350, nan, %v353
    $region34: #{tpu_custom_call.1} parent=1
      #allocation19 [shape = 'u8[4096]{0}', space=vmem, size = 0x1000, scoped, tag = 'scoped memory for tpu_custom_call.1']
      %355 = vst [vmem:[#allocation19] sm:$0xff] %v163
      %s356 = scalar_lea.vmem [#allocation19], 6
      %v357 = vld [vmem:[%s356] sm:$0x3]
      %v358 = vunpack.c.0.f8e4m3b11 %v357
      %v359 = vunpack.c.1.f8e4m3b11 %v357
      %v360 = vunpack.c.2.f8e4m3b11 %v357
      %v361 = vunpack.c.3.f8e4m3b11 %v357
      %v362 = vand.u32 2147483647, %v358
      %vm363 = vcmp.gt.f32.partialorder %v362, 29.0
      %vm364 = vcmp.ne.f32.partialorder %v358, %v358
      %v365 = vmul.f32 %v358, 16.0
      %v366 = vsel %vm364, -0.0, %v365
      %v367 = vsel %vm363, nan, %v366
      %v368 = vand.u32 2147483647, %v359
      %vm369 = vcmp.gt.f32.partialorder %v368, 29.0
      %vm370 = vcmp.ne.f32.partialorder %v359, %v359
      %v371 = vmul.f32 %v359, 16.0
      %v372 = vsel %vm370, -0.0, %v371
      %v373 = vsel %vm369, nan, %v372
      %v374 = vand.u32 2147483647, %v360
      %vm375 = vcmp.gt.f32.partialorder %v374, 29.0
      %vm376 = vcmp.ne.f32.partialorder %v360, %v360
      %v377 = vmul.f32 %v360, 16.0
      %v378 = vsel %vm376, -0.0, %v377
      %v379 = vsel %vm375, nan, %v378
      %v380 = vand.u32 2147483647, %v361
      %vm381 = vcmp.gt.f32.partialorder %v380, 29.0
      %vm382 = vcmp.ne.f32.partialorder %v361, %v361
      %v383 = vmul.f32 %v361, 16.0
      %v384 = vsel %vm382, -0.0, %v383
      %v385 = vsel %vm381, nan, %v384
    $region35: #{tpu_custom_call.1} parent=1
      #allocation20 [shape = 'u8[4096]{0}', space=vmem, size = 0x1000, scoped, tag = 'scoped memory for tpu_custom_call.1']
      %386 = vst [vmem:[#allocation20] sm:$0xff] %v164
      %s387 = scalar_lea.vmem [#allocation20], 6
      %v388 = vld [vmem:[%s387] sm:$0x3]
      %v389 = vunpack.c.0.f8e4m3b11 %v388
      %v390 = vunpack.c.1.f8e4m3b11 %v388
      %v391 = vunpack.c.2.f8e4m3b11 %v388
      %v392 = vunpack.c.3.f8e4m3b11 %v388
      %v393 = vand.u32 2147483647, %v389
      %vm394 = vcmp.gt.f32.partialorder %v393, 29.0
      %vm395 = vcmp.ne.f32.partialorder %v389, %v389
      %v396 = vmul.f32 %v389, 16.0
      %v397 = vsel %vm395, -0.0, %v396
      %v398 = vsel %vm394, nan, %v397
      %v399 = vand.u32 2147483647, %v390
      %vm400 = vcmp.gt.f32.partialorder %v399, 29.0
      %vm401 = vcmp.ne.f32.partialorder %v390, %v390
      %v402 = vmul.f32 %v390, 16.0
      %v403 = vsel %vm401, -0.0, %v402
      %v404 = vsel %vm400, nan, %v403
      %v405 = vand.u32 2147483647, %v391
      %vm406 = vcmp.gt.f32.partialorder %v405, 29.0
      %vm407 = vcmp.ne.f32.partialorder %v391, %v391
      %v408 = vmul.f32 %v391, 16.0
      %v409 = vsel %vm407, -0.0, %v408
      %v410 = vsel %vm406, nan, %v409
      %v411 = vand.u32 2147483647, %v392
      %vm412 = vcmp.gt.f32.partialorder %v411, 29.0
      %vm413 = vcmp.ne.f32.partialorder %v392, %v392
      %v414 = vmul.f32 %v392, 16.0
      %v415 = vsel %vm413, -0.0, %v414
      %v416 = vsel %vm412, nan, %v415
    $region36: #{tpu_custom_call.1} parent=1
      #allocation21 [shape = 'u8[4096]{0}', space=vmem, size = 0x1000, scoped, tag = 'scoped memory for tpu_custom_call.1']
      %417 = vst [vmem:[#allocation21] sm:$0xff] %v165
      %v418 = vld [vmem:[#allocation21] sm:$0x3]
      %v419 = vunpack.c.0.f8e4m3b11 %v418
      %v420 = vunpack.c.1.f8e4m3b11 %v418
      %v421 = vunpack.c.2.f8e4m3b11 %v418
      %v422 = vunpack.c.3.f8e4m3b11 %v418
      %v423 = vand.u32 2147483647, %v419
      %vm424 = vcmp.gt.f32.partialorder %v423, 29.0
      %vm425 = vcmp.ne.f32.partialorder %v419, %v419
      %v426 = vmul.f32 %v419, 16.0
      %v427 = vsel %vm425, -0.0, %v426
      %v428 = vsel %vm424, nan, %v427
      %v429 = vand.u32 2147483647, %v420
      %vm430 = vcmp.gt.f32.partialorder %v429, 29.0
      %vm431 = vcmp.ne.f32.partialorder %v420, %v420
      %v432 = vmul.f32 %v420, 16.0
      %v433 = vsel %vm431, -0.0, %v432
      %v434 = vsel %vm430, nan, %v433
      %v435 = vand.u32 2147483647, %v421
      %vm436 = vcmp.gt.f32.partialorder %v435, 29.0
      %vm437 = vcmp.ne.f32.partialorder %v421, %v421
      %v438 = vmul.f32 %v421, 16.0
      %v439 = vsel %vm437, -0.0, %v438
      %v440 = vsel %vm436, nan, %v439
      %v441 = vand.u32 2147483647, %v422
      %vm442 = vcmp.gt.f32.partialorder %v441, 29.0
      %vm443 = vcmp.ne.f32.partialorder %v422, %v422
      %v444 = vmul.f32 %v422, 16.0
      %v445 = vsel %vm443, -0.0, %v444
      %v446 = vsel %vm442, nan, %v445
    $region37: #{tpu_custom_call.1} parent=1
      #allocation22 [shape = 'u8[4096]{0}', space=vmem, size = 0x1000, scoped, tag = 'scoped memory for tpu_custom_call.1']
      %447 = vst [vmem:[#allocation22] sm:$0xff] %v166
      %v448 = vld [vmem:[#allocation22] sm:$0x3]
      %v449 = vunpack.c.0.f8e4m3b11 %v448
      %v450 = vunpack.c.1.f8e4m3b11 %v448
      %v451 = vunpack.c.2.f8e4m3b11 %v448
      %v452 = vunpack.c.3.f8e4m3b11 %v448
      %v453 = vand.u32 2147483647, %v449
      %vm454 = vcmp.gt.f32.partialorder %v453, 29.0
      %vm455 = vcmp.ne.f32.partialorder %v449, %v449
      %v456 = vmul.f32 %v449, 16.0
      %v457 = vsel %vm455, -0.0, %v456
      %v458 = vsel %vm454, nan, %v457
      %v459 = vand.u32 2147483647, %v450
      %vm460 = vcmp.gt.f32.partialorder %v459, 29.0
      %vm461 = vcmp.ne.f32.partialorder %v450, %v450
      %v462 = vmul.f32 %v450, 16.0
      %v463 = vsel %vm461, -0.0, %v462
      %v464 = vsel %vm460, nan, %v463
      %v465 = vand.u32 2147483647, %v451
      %vm466 = vcmp.gt.f32.partialorder %v465, 29.0
      %vm467 = vcmp.ne.f32.partialorder %v451, %v451
      %v468 = vmul.f32 %v451, 16.0
      %v469 = vsel %vm467, -0.0, %v468
      %v470 = vsel %vm466, nan, %v469
      %v471 = vand.u32 2147483647, %v452
      %vm472 = vcmp.gt.f32.partialorder %v471, 29.0
      %vm473 = vcmp.ne.f32.partialorder %v452, %v452
      %v474 = vmul.f32 %v452, 16.0
      %v475 = vsel %vm473, -0.0, %v474
      %v476 = vsel %vm472, nan, %v475
    $region38: #{tpu_custom_call.1} parent=1
      #allocation23 [shape = 'u8[4096]{0}', space=vmem, size = 0x1000, scoped, tag = 'scoped memory for tpu_custom_call.1']
      %477 = vst [vmem:[#allocation23] sm:$0xff] %v165
      %s478 = scalar_lea.vmem [#allocation23], 2
      %v479 = vld [vmem:[%s478] sm:$0x3]
      %v480 = vunpack.c.0.f8e4m3b11 %v479
      %v481 = vunpack.c.1.f8e4m3b11 %v479
      %v482 = vunpack.c.2.f8e4m3b11 %v479
      %v483 = vunpack.c.3.f8e4m3b11 %v479
      %v484 = vand.u32 2147483647, %v480
      %vm485 = vcmp.gt.f32.partialorder %v484, 29.0
      %vm486 = vcmp.ne.f32.partialorder %v480, %v480
      %v487 = vmul.f32 %v480, 16.0
      %v488 = vsel %vm486, -0.0, %v487
      %v489 = vsel %vm485, nan, %v488
      %v490 = vand.u32 2147483647, %v481
      %vm491 = vcmp.gt.f32.partialorder %v490, 29.0
      %vm492 = vcmp.ne.f32.partialorder %v481, %v481
      %v493 = vmul.f32 %v481, 16.0
      %v494 = vsel %vm492, -0.0, %v493
      %v495 = vsel %vm491, nan, %v494
      %v496 = vand.u32 2147483647, %v482
      %vm497 = vcmp.gt.f32.partialorder %v496, 29.0
      %vm498 = vcmp.ne.f32.partialorder %v482, %v482
      %v499 = vmul.f32 %v482, 16.0
      %v500 = vsel %vm498, -0.0, %v499
      %v501 = vsel %vm497, nan, %v500
      %v502 = vand.u32 2147483647, %v483
      %vm503 = vcmp.gt.f32.partialorder %v502, 29.0
      %vm504 = vcmp.ne.f32.partialorder %v483, %v483
      %v505 = vmul.f32 %v483, 16.0
      %v506 = vsel %vm504, -0.0, %v505
      %v507 = vsel %vm503, nan, %v506
    $region39: #{tpu_custom_call.1} parent=1
      #allocation24 [shape = 'u8[4096]{0}', space=vmem, size = 0x1000, scoped, tag = 'scoped memory for tpu_custom_call.1']
      %508 = vst [vmem:[#allocation24] sm:$0xff] %v166
      %s509 = scalar_lea.vmem [#allocation24], 2
      %v510 = vld [vmem:[%s509] sm:$0x3]
      %v511 = vunpack.c.0.f8e4m3b11 %v510
      %v512 = vunpack.c.1.f8e4m3b11 %v510
      %v513 = vunpack.c.2.f8e4m3b11 %v510
      %v514 = vunpack.c.3.f8e4m3b11 %v510
      %v515 = vand.u32 2147483647, %v511
      %vm516 = vcmp.gt.f32.partialorder %v515, 29.0
      %vm517 = vcmp.ne.f32.partialorder %v511, %v511
      %v518 = vmul.f32 %v511, 16.0
      %v519 = vsel %vm517, -0.0, %v518
      %v520 = vsel %vm516, nan, %v519
      %v521 = vand.u32 2147483647, %v512
      %vm522 = vcmp.gt.f32.partialorder %v521, 29.0
      %vm523 = vcmp.ne.f32.partialorder %v512, %v512
      %v524 = vmul.f32 %v512, 16.0
      %v525 = vsel %vm523, -0.0, %v524
      %v526 = vsel %vm522, nan, %v525
      %v527 = vand.u32 2147483647, %v513
      %vm528 = vcmp.gt.f32.partialorder %v527, 29.0
      %vm529 = vcmp.ne.f32.partialorder %v513, %v513
      %v530 = vmul.f32 %v513, 16.0
      %v531 = vsel %vm529, -0.0, %v530
      %v532 = vsel %vm528, nan, %v531
      %v533 = vand.u32 2147483647, %v514
      %vm534 = vcmp.gt.f32.partialorder %v533, 29.0
      %vm535 = vcmp.ne.f32.partialorder %v514, %v514
      %v536 = vmul.f32 %v514, 16.0
      %v537 = vsel %vm535, -0.0, %v536
      %v538 = vsel %vm534, nan, %v537
    $region40: #{tpu_custom_call.1} parent=1
      #allocation25 [shape = 'u8[4096]{0}', space=vmem, size = 0x1000, scoped, tag = 'scoped memory for tpu_custom_call.1']
      %539 = vst [vmem:[#allocation25] sm:$0xff] %v165
      %s540 = scalar_lea.vmem [#allocation25], 4
      %v541 = vld [vmem:[%s540] sm:$0x3]
      %v542 = vunpack.c.0.f8e4m3b11 %v541
      %v543 = vunpack.c.1.f8e4m3b11 %v541
      %v544 = vunpack.c.2.f8e4m3b11 %v541
      %v545 = vunpack.c.3.f8e4m3b11 %v541
      %v546 = vand.u32 2147483647, %v542
      %vm547 = vcmp.gt.f32.partialorder %v546, 29.0
      %vm548 = vcmp.ne.f32.partialorder %v542, %v542
      %v549 = vmul.f32 %v542, 16.0
      %v550 = vsel %vm548, -0.0, %v549
      %v551 = vsel %vm547, nan, %v550
      %v552 = vand.u32 2147483647, %v543
      %vm553 = vcmp.gt.f32.partialorder %v552, 29.0
      %vm554 = vcmp.ne.f32.partialorder %v543, %v543
      %v555 = vmul.f32 %v543, 16.0
      %v556 = vsel %vm554, -0.0, %v555
      %v557 = vsel %vm553, nan, %v556
      %v558 = vand.u32 2147483647, %v544
      %vm559 = vcmp.gt.f32.partialorder %v558, 29.0
      %vm560 = vcmp.ne.f32.partialorder %v544, %v544
      %v561 = vmul.f32 %v544, 16.0
      %v562 = vsel %vm560, -0.0, %v561
      %v563 = vsel %vm559, nan, %v562
      %v564 = vand.u32 2147483647, %v545
      %vm565 = vcmp.gt.f32.partialorder %v564, 29.0
      %vm566 = vcmp.ne.f32.partialorder %v545, %v545
      %v567 = vmul.f32 %v545, 16.0
      %v568 = vsel %vm566, -0.0, %v567
      %v569 = vsel %vm565, nan, %v568
    $region41: #{tpu_custom_call.1} parent=1
      #allocation26 [shape = 'u8[4096]{0}', space=vmem, size = 0x1000, scoped, tag = 'scoped memory for tpu_custom_call.1']
      %570 = vst [vmem:[#allocation26] sm:$0xff] %v166
      %s571 = scalar_lea.vmem [#allocation26], 4
      %v572 = vld [vmem:[%s571] sm:$0x3]
      %v573 = vunpack.c.0.f8e4m3b11 %v572
      %v574 = vunpack.c.1.f8e4m3b11 %v572
      %v575 = vunpack.c.2.f8e4m3b11 %v572
      %v576 = vunpack.c.3.f8e4m3b11 %v572
      %v577 = vand.u32 2147483647, %v573
      %vm578 = vcmp.gt.f32.partialorder %v577, 29.0
      %vm579 = vcmp.ne.f32.partialorder %v573, %v573
      %v580 = vmul.f32 %v573, 16.0
      %v581 = vsel %vm579, -0.0, %v580
      %v582 = vsel %vm578, nan, %v581
      %v583 = vand.u32 2147483647, %v574
      %vm584 = vcmp.gt.f32.partialorder %v583, 29.0
      %vm585 = vcmp.ne.f32.partialorder %v574, %v574
      %v586 = vmul.f32 %v574, 16.0
      %v587 = vsel %vm585, -0.0, %v586
      %v588 = vsel %vm584, nan, %v587
      %v589 = vand.u32 2147483647, %v575
      %vm590 = vcmp.gt.f32.partialorder %v589, 29.0
      %vm591 = vcmp.ne.f32.partialorder %v575, %v575
      %v592 = vmul.f32 %v575, 16.0
      %v593 = vsel %vm591, -0.0, %v592
      %v594 = vsel %vm590, nan, %v593
      %v595 = vand.u32 2147483647, %v576
      %vm596 = vcmp.gt.f32.partialorder %v595, 29.0
      %vm597 = vcmp.ne.f32.partialorder %v576, %v576
      %v598 = vmul.f32 %v576, 16.0
      %v599 = vsel %vm597, -0.0, %v598
      %v600 = vsel %vm596, nan, %v599
    $region42: #{tpu_custom_call.1} parent=1
      #allocation27 [shape = 'u8[4096]{0}', space=vmem, size = 0x1000, scoped, tag = 'scoped memory for tpu_custom_call.1']
      %601 = vst [vmem:[#allocation27] sm:$0xff] %v165
      %s602 = scalar_lea.vmem [#allocation27], 6
      %v603 = vld [vmem:[%s602] sm:$0x3]
      %v604 = vunpack.c.0.f8e4m3b11 %v603
      %v605 = vunpack.c.1.f8e4m3b11 %v603
      %v606 = vunpack.c.2.f8e4m3b11 %v603
      %v607 = vunpack.c.3.f8e4m3b11 %v603
      %v608 = vand.u32 2147483647, %v604
      %vm609 = vcmp.gt.f32.partialorder %v608, 29.0
      %vm610 = vcmp.ne.f32.partialorder %v604, %v604
      %v611 = vmul.f32 %v604, 16.0
      %v612 = vsel %vm610, -0.0, %v611
      %v613 = vsel %vm609, nan, %v612
      %v614 = vand.u32 2147483647, %v605
      %vm615 = vcmp.gt.f32.partialorder %v614, 29.0
      %vm616 = vcmp.ne.f32.partialorder %v605, %v605
      %v617 = vmul.f32 %v605, 16.0
      %v618 = vsel %vm616, -0.0, %v617
      %v619 = vsel %vm615, nan, %v618
      %v620 = vand.u32 2147483647, %v606
      %vm621 = vcmp.gt.f32.partialorder %v620, 29.0
      %vm622 = vcmp.ne.f32.partialorder %v606, %v606
      %v623 = vmul.f32 %v606, 16.0
      %v624 = vsel %vm622, -0.0, %v623
      %v625 = vsel %vm621, nan, %v624
      %v626 = vand.u32 2147483647, %v607
      %vm627 = vcmp.gt.f32.partialorder %v626, 29.0
      %vm628 = vcmp.ne.f32.partialorder %v607, %v607
      %v629 = vmul.f32 %v607, 16.0
      %v630 = vsel %vm628, -0.0, %v629
      %v631 = vsel %vm627, nan, %v630
    $region43: #{tpu_custom_call.1} parent=1
      #allocation28 [shape = 'u8[4096]{0}', space=vmem, size = 0x1000, scoped, tag = 'scoped memory for tpu_custom_call.1']
      %632 = vst [vmem:[#allocation28] sm:$0xff] %v166
      %s633 = scalar_lea.vmem [#allocation28], 6
      %v634 = vld [vmem:[%s633] sm:$0x3]
      %v635 = vunpack.c.0.f8e4m3b11 %v634
      %v636 = vunpack.c.1.f8e4m3b11 %v634
      %v637 = vunpack.c.2.f8e4m3b11 %v634
      %v638 = vunpack.c.3.f8e4m3b11 %v634
      %v639 = vand.u32 2147483647, %v635
      %vm640 = vcmp.gt.f32.partialorder %v639, 29.0
      %vm641 = vcmp.ne.f32.partialorder %v635, %v635
      %v642 = vmul.f32 %v635, 16.0
      %v643 = vsel %vm641, -0.0, %v642
      %v644 = vsel %vm640, nan, %v643
      %v645 = vand.u32 2147483647, %v636
      %vm646 = vcmp.gt.f32.partialorder %v645, 29.0
      %vm647 = vcmp.ne.f32.partialorder %v636, %v636
      %v648 = vmul.f32 %v636, 16.0
      %v649 = vsel %vm647, -0.0, %v648
      %v650 = vsel %vm646, nan, %v649
      %v651 = vand.u32 2147483647, %v637
      %vm652 = vcmp.gt.f32.partialorder %v651, 29.0
      %vm653 = vcmp.ne.f32.partialorder %v637, %v637
      %v654 = vmul.f32 %v637, 16.0
      %v655 = vsel %vm653, -0.0, %v654
      %v656 = vsel %vm652, nan, %v655
      %v657 = vand.u32 2147483647, %v638
      %vm658 = vcmp.gt.f32.partialorder %v657, 29.0
      %vm659 = vcmp.ne.f32.partialorder %v638, %v638
      %v660 = vmul.f32 %v638, 16.0
      %v661 = vsel %vm659, -0.0, %v660
      %v662 = vsel %vm658, nan, %v661
    $region44: #{tpu_custom_call.1} parent=1
      #allocation29 [shape = 'u8[4096]{0}', space=vmem, size = 0x1000, scoped, tag = 'scoped memory for tpu_custom_call.1']
      %663 = vst [vmem:[#allocation29] sm:$0xff] %v167
      %v664 = vld [vmem:[#allocation29] sm:$0x3]
      %v665 = vunpack.c.0.f8e4m3b11 %v664
      %v666 = vunpack.c.1.f8e4m3b11 %v664
      %v667 = vunpack.c.2.f8e4m3b11 %v664
      %v668 = vunpack.c.3.f8e4m3b11 %v664
      %v669 = vand.u32 2147483647, %v665
      %vm670 = vcmp.gt.f32.partialorder %v669, 29.0
      %vm671 = vcmp.ne.f32.partialorder %v665, %v665
      %v672 = vmul.f32 %v665, 16.0
      %v673 = vsel %vm671, -0.0, %v672
      %v674 = vsel %vm670, nan, %v673
      %v675 = vand.u32 2147483647, %v666
      %vm676 = vcmp.gt.f32.partialorder %v675, 29.0
      %vm677 = vcmp.ne.f32.partialorder %v666, %v666
      %v678 = vmul.f32 %v666, 16.0
      %v679 = vsel %vm677, -0.0, %v678
      %v680 = vsel %vm676, nan, %v679
      %v681 = vand.u32 2147483647, %v667
      %vm682 = vcmp.gt.f32.partialorder %v681, 29.0
      %vm683 = vcmp.ne.f32.partialorder %v667, %v667
      %v684 = vmul.f32 %v667, 16.0
      %v685 = vsel %vm683, -0.0, %v684
      %v686 = vsel %vm682, nan, %v685
      %v687 = vand.u32 2147483647, %v668
      %vm688 = vcmp.gt.f32.partialorder %v687, 29.0
      %vm689 = vcmp.ne.f32.partialorder %v668, %v668
      %v690 = vmul.f32 %v668, 16.0
      %v691 = vsel %vm689, -0.0, %v690
      %v692 = vsel %vm688, nan, %v691
    $region45: #{tpu_custom_call.1} parent=1
      #allocation30 [shape = 'u8[4096]{0}', space=vmem, size = 0x1000, scoped, tag = 'scoped memory for tpu_custom_call.1']
      %693 = vst [vmem:[#allocation30] sm:$0xff] %v168
      %v694 = vld [vmem:[#allocation30] sm:$0x3]
      %v695 = vunpack.c.0.f8e4m3b11 %v694
      %v696 = vunpack.c.1.f8e4m3b11 %v694
      %v697 = vunpack.c.2.f8e4m3b11 %v694
      %v698 = vunpack.c.3.f8e4m3b11 %v694
      %v699 = vand.u32 2147483647, %v695
      %vm700 = vcmp.gt.f32.partialorder %v699, 29.0
      %vm701 = vcmp.ne.f32.partialorder %v695, %v695
      %v702 = vmul.f32 %v695, 16.0
      %v703 = vsel %vm701, -0.0, %v702
      %v704 = vsel %vm700, nan, %v703
      %v705 = vand.u32 2147483647, %v696
      %vm706 = vcmp.gt.f32.partialorder %v705, 29.0
      %vm707 = vcmp.ne.f32.partialorder %v696, %v696
      %v708 = vmul.f32 %v696, 16.0
      %v709 = vsel %vm707, -0.0, %v708
      %v710 = vsel %vm706, nan, %v709
      %v711 = vand.u32 2147483647, %v697
      %vm712 = vcmp.gt.f32.partialorder %v711, 29.0
      %vm713 = vcmp.ne.f32.partialorder %v697, %v697
      %v714 = vmul.f32 %v697, 16.0
      %v715 = vsel %vm713, -0.0, %v714
      %v716 = vsel %vm712, nan, %v715
      %v717 = vand.u32 2147483647, %v698
      %vm718 = vcmp.gt.f32.partialorder %v717, 29.0
      %vm719 = vcmp.ne.f32.partialorder %v698, %v698
      %v720 = vmul.f32 %v698, 16.0
      %v721 = vsel %vm719, -0.0, %v720
      %v722 = vsel %vm718, nan, %v721
    $region46: #{tpu_custom_call.1} parent=1
      #allocation31 [shape = 'u8[4096]{0}', space=vmem, size = 0x1000, scoped, tag = 'scoped memory for tpu_custom_call.1']
      %723 = vst [vmem:[#allocation31] sm:$0xff] %v167
      %s724 = scalar_lea.vmem [#allocation31], 2
      %v725 = vld [vmem:[%s724] sm:$0x3]
      %v726 = vunpack.c.0.f8e4m3b11 %v725
      %v727 = vunpack.c.1.f8e4m3b11 %v725
      %v728 = vunpack.c.2.f8e4m3b11 %v725
      %v729 = vunpack.c.3.f8e4m3b11 %v725
      %v730 = vand.u32 2147483647, %v726
      %vm731 = vcmp.gt.f32.partialorder %v730, 29.0
      %vm732 = vcmp.ne.f32.partialorder %v726, %v726
      %v733 = vmul.f32 %v726, 16.0
      %v734 = vsel %vm732, -0.0, %v733
      %v735 = vsel %vm731, nan, %v734
      %v736 = vand.u32 2147483647, %v727
      %vm737 = vcmp.gt.f32.partialorder %v736, 29.0
      %vm738 = vcmp.ne.f32.partialorder %v727, %v727
      %v739 = vmul.f32 %v727, 16.0
      %v740 = vsel %vm738, -0.0, %v739
      %v741 = vsel %vm737, nan, %v740
      %v742 = vand.u32 2147483647, %v728
      %vm743 = vcmp.gt.f32.partialorder %v742, 29.0
      %vm744 = vcmp.ne.f32.partialorder %v728, %v728
      %v745 = vmul.f32 %v728, 16.0
      %v746 = vsel %vm744, -0.0, %v745
      %v747 = vsel %vm743, nan, %v746
      %v748 = vand.u32 2147483647, %v729
      %vm749 = vcmp.gt.f32.partialorder %v748, 29.0
      %vm750 = vcmp.ne.f32.partialorder %v729, %v729
      %v751 = vmul.f32 %v729, 16.0
      %v752 = vsel %vm750, -0.0, %v751
      %v753 = vsel %vm749, nan, %v752
    $region47: #{tpu_custom_call.1} parent=1
      #allocation32 [shape = 'u8[4096]{0}', space=vmem, size = 0x1000, scoped, tag = 'scoped memory for tpu_custom_call.1']
      %754 = vst [vmem:[#allocation32] sm:$0xff] %v168
      %s755 = scalar_lea.vmem [#allocation32], 2
      %v756 = vld [vmem:[%s755] sm:$0x3]
      %v757 = vunpack.c.0.f8e4m3b11 %v756
      %v758 = vunpack.c.1.f8e4m3b11 %v756
      %v759 = vunpack.c.2.f8e4m3b11 %v756
      %v760 = vunpack.c.3.f8e4m3b11 %v756
      %v761 = vand.u32 2147483647, %v757
      %vm762 = vcmp.gt.f32.partialorder %v761, 29.0
      %vm763 = vcmp.ne.f32.partialorder %v757, %v757
      %v764 = vmul.f32 %v757, 16.0
      %v765 = vsel %vm763, -0.0, %v764
      %v766 = vsel %vm762, nan, %v765
      %v767 = vand.u32 2147483647, %v758
      %vm768 = vcmp.gt.f32.partialorder %v767, 29.0
      %vm769 = vcmp.ne.f32.partialorder %v758, %v758
      %v770 = vmul.f32 %v758, 16.0
      %v771 = vsel %vm769, -0.0, %v770
      %v772 = vsel %vm768, nan, %v771
      %v773 = vand.u32 2147483647, %v759
      %vm774 = vcmp.gt.f32.partialorder %v773, 29.0
      %vm775 = vcmp.ne.f32.partialorder %v759, %v759
      %v776 = vmul.f32 %v759, 16.0
      %v777 = vsel %vm775, -0.0, %v776
      %v778 = vsel %vm774, nan, %v777
      %v779 = vand.u32 2147483647, %v760
      %vm780 = vcmp.gt.f32.partialorder %v779, 29.0
      %vm781 = vcmp.ne.f32.partialorder %v760, %v760
      %v782 = vmul.f32 %v760, 16.0
      %v783 = vsel %vm781, -0.0, %v782
      %v784 = vsel %vm780, nan, %v783
    $region48: #{tpu_custom_call.1} parent=1
      #allocation33 [shape = 'u8[4096]{0}', space=vmem, size = 0x1000, scoped, tag = 'scoped memory for tpu_custom_call.1']
      %785 = vst [vmem:[#allocation33] sm:$0xff] %v167
      %s786 = scalar_lea.vmem [#allocation33], 4
      %v787 = vld [vmem:[%s786] sm:$0x3]
      %v788 = vunpack.c.0.f8e4m3b11 %v787
      %v789 = vunpack.c.1.f8e4m3b11 %v787
      %v790 = vunpack.c.2.f8e4m3b11 %v787
      %v791 = vunpack.c.3.f8e4m3b11 %v787
      %v792 = vand.u32 2147483647, %v788
      %vm793 = vcmp.gt.f32.partialorder %v792, 29.0
      %vm794 = vcmp.ne.f32.partialorder %v788, %v788
      %v795 = vmul.f32 %v788, 16.0
      %v796 = vsel %vm794, -0.0, %v795
      %v797 = vsel %vm793, nan, %v796
      %v798 = vand.u32 2147483647, %v789
      %vm799 = vcmp.gt.f32.partialorder %v798, 29.0
      %vm800 = vcmp.ne.f32.partialorder %v789, %v789
      %v801 = vmul.f32 %v789, 16.0
      %v802 = vsel %vm800, -0.0, %v801
      %v803 = vsel %vm799, nan, %v802
      %v804 = vand.u32 2147483647, %v790
      %vm805 = vcmp.gt.f32.partialorder %v804, 29.0
      %vm806 = vcmp.ne.f32.partialorder %v790, %v790
      %v807 = vmul.f32 %v790, 16.0
      %v808 = vsel %vm806, -0.0, %v807
      %v809 = vsel %vm805, nan, %v808
      %v810 = vand.u32 2147483647, %v791
      %vm811 = vcmp.gt.f32.partialorder %v810, 29.0
      %vm812 = vcmp.ne.f32.partialorder %v791, %v791
      %v813 = vmul.f32 %v791, 16.0
      %v814 = vsel %vm812, -0.0, %v813
      %v815 = vsel %vm811, nan, %v814
    $region49: #{tpu_custom_call.1} parent=1
      #allocation34 [shape = 'u8[4096]{0}', space=vmem, size = 0x1000, scoped, tag = 'scoped memory for tpu_custom_call.1']
      %816 = vst [vmem:[#allocation34] sm:$0xff] %v168
      %s817 = scalar_lea.vmem [#allocation34], 4
      %v818 = vld [vmem:[%s817] sm:$0x3]
      %v819 = vunpack.c.0.f8e4m3b11 %v818
      %v820 = vunpack.c.1.f8e4m3b11 %v818
      %v821 = vunpack.c.2.f8e4m3b11 %v818
      %v822 = vunpack.c.3.f8e4m3b11 %v818
      %v823 = vand.u32 2147483647, %v819
      %vm824 = vcmp.gt.f32.partialorder %v823, 29.0
      %vm825 = vcmp.ne.f32.partialorder %v819, %v819
      %v826 = vmul.f32 %v819, 16.0
      %v827 = vsel %vm825, -0.0, %v826
      %v828 = vsel %vm824, nan, %v827
      %v829 = vand.u32 2147483647, %v820
      %vm830 = vcmp.gt.f32.partialorder %v829, 29.0
      %vm831 = vcmp.ne.f32.partialorder %v820, %v820
      %v832 = vmul.f32 %v820, 16.0
      %v833 = vsel %vm831, -0.0, %v832
      %v834 = vsel %vm830, nan, %v833
      %v835 = vand.u32 2147483647, %v821
      %vm836 = vcmp.gt.f32.partialorder %v835, 29.0
      %vm837 = vcmp.ne.f32.partialorder %v821, %v821
      %v838 = vmul.f32 %v821, 16.0
      %v839 = vsel %vm837, -0.0, %v838
      %v840 = vsel %vm836, nan, %v839
      %v841 = vand.u32 2147483647, %v822
      %vm842 = vcmp.gt.f32.partialorder %v841, 29.0
      %vm843 = vcmp.ne.f32.partialorder %v822, %v822
      %v844 = vmul.f32 %v822, 16.0
      %v845 = vsel %vm843, -0.0, %v844
      %v846 = vsel %vm842, nan, %v845
    $region50: #{tpu_custom_call.1} parent=1
      #allocation35 [shape = 'u8[4096]{0}', space=vmem, size = 0x1000, scoped, tag = 'scoped memory for tpu_custom_call.1']
      %847 = vst [vmem:[#allocation35] sm:$0xff] %v167
      %s848 = scalar_lea.vmem [#allocation35], 6
      %v849 = vld [vmem:[%s848] sm:$0x3]
      %v850 = vunpack.c.0.f8e4m3b11 %v849
      %v851 = vunpack.c.1.f8e4m3b11 %v849
      %v852 = vunpack.c.2.f8e4m3b11 %v849
      %v853 = vunpack.c.3.f8e4m3b11 %v849
      %v854 = vand.u32 2147483647, %v850
      %vm855 = vcmp.gt.f32.partialorder %v854, 29.0
      %vm856 = vcmp.ne.f32.partialorder %v850, %v850
      %v857 = vmul.f32 %v850, 16.0
      %v858 = vsel %vm856, -0.0, %v857
      %v859 = vsel %vm855, nan, %v858
      %v860 = vand.u32 2147483647, %v851
      %vm861 = vcmp.gt.f32.partialorder %v860, 29.0
      %vm862 = vcmp.ne.f32.partialorder %v851, %v851
      %v863 = vmul.f32 %v851, 16.0
      %v864 = vsel %vm862, -0.0, %v863
      %v865 = vsel %vm861, nan, %v864
      %v866 = vand.u32 2147483647, %v852
      %vm867 = vcmp.gt.f32.partialorder %v866, 29.0
      %vm868 = vcmp.ne.f32.partialorder %v852, %v852
      %v869 = vmul.f32 %v852, 16.0
      %v870 = vsel %vm868, -0.0, %v869
      %v871 = vsel %vm867, nan, %v870
      %v872 = vand.u32 2147483647, %v853
      %vm873 = vcmp.gt.f32.partialorder %v872, 29.0
      %vm874 = vcmp.ne.f32.partialorder %v853, %v853
      %v875 = vmul.f32 %v853, 16.0
      %v876 = vsel %vm874, -0.0, %v875
      %v877 = vsel %vm873, nan, %v876
    $region51: #{tpu_custom_call.1} parent=1
      #allocation36 [shape = 'u8[4096]{0}', space=vmem, size = 0x1000, scoped, tag = 'scoped memory for tpu_custom_call.1']
      %878 = vst [vmem:[#allocation36] sm:$0xff] %v168
      %s879 = scalar_lea.vmem [#allocation36], 6
      %v880 = vld [vmem:[%s879] sm:$0x3]
      %v881 = vunpack.c.0.f8e4m3b11 %v880
      %v882 = vunpack.c.1.f8e4m3b11 %v880
      %v883 = vunpack.c.2.f8e4m3b11 %v880
      %v884 = vunpack.c.3.f8e4m3b11 %v880
      %v885 = vand.u32 2147483647, %v881
      %vm886 = vcmp.gt.f32.partialorder %v885, 29.0
      %vm887 = vcmp.ne.f32.partialorder %v881, %v881
      %v888 = vmul.f32 %v881, 16.0
      %v889 = vsel %vm887, -0.0, %v888
      %v890 = vsel %vm886, nan, %v889
      %v891 = vand.u32 2147483647, %v882
      %vm892 = vcmp.gt.f32.partialorder %v891, 29.0
      %vm893 = vcmp.ne.f32.partialorder %v882, %v882
      %v894 = vmul.f32 %v882, 16.0
      %v895 = vsel %vm893, -0.0, %v894
      %v896 = vsel %vm892, nan, %v895
      %v897 = vand.u32 2147483647, %v883
      %vm898 = vcmp.gt.f32.partialorder %v897, 29.0
      %vm899 = vcmp.ne.f32.partialorder %v883, %v883
      %v900 = vmul.f32 %v883, 16.0
      %v901 = vsel %vm899, -0.0, %v900
      %v902 = vsel %vm898, nan, %v901
      %v903 = vand.u32 2147483647, %v884
      %vm904 = vcmp.gt.f32.partialorder %v903, 29.0
      %vm905 = vcmp.ne.f32.partialorder %v884, %v884
      %v906 = vmul.f32 %v884, 16.0
      %v907 = vsel %vm905, -0.0, %v906
      %v908 = vsel %vm904, nan, %v907
    $region52: #{tpu_custom_call.1} parent=1
      #allocation37 [shape = 'u8[4096]{0}', space=vmem, size = 0x1000, scoped, tag = 'scoped memory for tpu_custom_call.1']
      %909 = vst [vmem:[#allocation37] sm:$0xff] %v169
      %v910 = vld [vmem:[#allocation37] sm:$0x3]
      %v911 = vunpack.c.0.f8e4m3b11 %v910
      %v912 = vunpack.c.1.f8e4m3b11 %v910
      %v913 = vunpack.c.2.f8e4m3b11 %v910
      %v914 = vunpack.c.3.f8e4m3b11 %v910
      %v915 = vand.u32 2147483647, %v911
      %vm916 = vcmp.gt.f32.partialorder %v915, 29.0
      %vm917 = vcmp.ne.f32.partialorder %v911, %v911
      %v918 = vmul.f32 %v911, 16.0
      %v919 = vsel %vm917, -0.0, %v918
      %v920 = vsel %vm916, nan, %v919
      %v921 = vand.u32 2147483647, %v912
      %vm922 = vcmp.gt.f32.partialorder %v921, 29.0
      %vm923 = vcmp.ne.f32.partialorder %v912, %v912
      %v924 = vmul.f32 %v912, 16.0
      %v925 = vsel %vm923, -0.0, %v924
      %v926 = vsel %vm922, nan, %v925
      %v927 = vand.u32 2147483647, %v913
      %vm928 = vcmp.gt.f32.partialorder %v927, 29.0
      %vm929 = vcmp.ne.f32.partialorder %v913, %v913
      %v930 = vmul.f32 %v913, 16.0
      %v931 = vsel %vm929, -0.0, %v930
      %v932 = vsel %vm928, nan, %v931
      %v933 = vand.u32 2147483647, %v914
      %vm934 = vcmp.gt.f32.partialorder %v933, 29.0
      %vm935 = vcmp.ne.f32.partialorder %v914, %v914
      %v936 = vmul.f32 %v914, 16.0
      %v937 = vsel %vm935, -0.0, %v936
      %v938 = vsel %vm934, nan, %v937
    $region53: #{tpu_custom_call.1} parent=1
      #allocation38 [shape = 'u8[4096]{0}', space=vmem, size = 0x1000, scoped, tag = 'scoped memory for tpu_custom_call.1']
      %939 = vst [vmem:[#allocation38] sm:$0xff] %v170
      %v940 = vld [vmem:[#allocation38] sm:$0x3]
      %v941 = vunpack.c.0.f8e4m3b11 %v940
      %v942 = vunpack.c.1.f8e4m3b11 %v940
      %v943 = vunpack.c.2.f8e4m3b11 %v940
      %v944 = vunpack.c.3.f8e4m3b11 %v940
      %v945 = vand.u32 2147483647, %v941
      %vm946 = vcmp.gt.f32.partialorder %v945, 29.0
      %vm947 = vcmp.ne.f32.partialorder %v941, %v941
      %v948 = vmul.f32 %v941, 16.0
      %v949 = vsel %vm947, -0.0, %v948
      %v950 = vsel %vm946, nan, %v949
      %v951 = vand.u32 2147483647, %v942
      %vm952 = vcmp.gt.f32.partialorder %v951, 29.0
      %vm953 = vcmp.ne.f32.partialorder %v942, %v942
      %v954 = vmul.f32 %v942, 16.0
      %v955 = vsel %vm953, -0.0, %v954
      %v956 = vsel %vm952, nan, %v955
      %v957 = vand.u32 2147483647, %v943
      %vm958 = vcmp.gt.f32.partialorder %v957, 29.0
      %vm959 = vcmp.ne.f32.partialorder %v943, %v943
      %v960 = vmul.f32 %v943, 16.0
      %v961 = vsel %vm959, -0.0, %v960
      %v962 = vsel %vm958, nan, %v961
      %v963 = vand.u32 2147483647, %v944
      %vm964 = vcmp.gt.f32.partialorder %v963, 29.0
      %vm965 = vcmp.ne.f32.partialorder %v944, %v944
      %v966 = vmul.f32 %v944, 16.0
      %v967 = vsel %vm965, -0.0, %v966
      %v968 = vsel %vm964, nan, %v967
    $region54: #{tpu_custom_call.1} parent=1
      #allocation39 [shape = 'u8[4096]{0}', space=vmem, size = 0x1000, scoped, tag = 'scoped memory for tpu_custom_call.1']
      %969 = vst [vmem:[#allocation39] sm:$0xff] %v169
      %s970 = scalar_lea.vmem [#allocation39], 2
      %v971 = vld [vmem:[%s970] sm:$0x3]
      %v972 = vunpack.c.0.f8e4m3b11 %v971
      %v973 = vunpack.c.1.f8e4m3b11 %v971
      %v974 = vunpack.c.2.f8e4m3b11 %v971
      %v975 = vunpack.c.3.f8e4m3b11 %v971
      %v976 = vand.u32 2147483647, %v972
      %vm977 = vcmp.gt.f32.partialorder %v976, 29.0
      %vm978 = vcmp.ne.f32.partialorder %v972, %v972
      %v979 = vmul.f32 %v972, 16.0
      %v980 = vsel %vm978, -0.0, %v979
      %v981 = vsel %vm977, nan, %v980
      %v982 = vand.u32 2147483647, %v973
      %vm983 = vcmp.gt.f32.partialorder %v982, 29.0
      %vm984 = vcmp.ne.f32.partialorder %v973, %v973
      %v985 = vmul.f32 %v973, 16.0
      %v986 = vsel %vm984, -0.0, %v985
      %v987 = vsel %vm983, nan, %v986
      %v988 = vand.u32 2147483647, %v974
      %vm989 = vcmp.gt.f32.partialorder %v988, 29.0
      %vm990 = vcmp.ne.f32.partialorder %v974, %v974
      %v991 = vmul.f32 %v974, 16.0
      %v992 = vsel %vm990, -0.0, %v991
      %v993 = vsel %vm989, nan, %v992
      %v994 = vand.u32 2147483647, %v975
      %vm995 = vcmp.gt.f32.partialorder %v994, 29.0
      %vm996 = vcmp.ne.f32.partialorder %v975, %v975
      %v997 = vmul.f32 %v975, 16.0
      %v998 = vsel %vm996, -0.0, %v997
      %v999 = vsel %vm995, nan, %v998
    $region55: #{tpu_custom_call.1} parent=1
      #allocation40 [shape = 'u8[4096]{0}', space=vmem, size = 0x1000, scoped, tag = 'scoped memory for tpu_custom_call.1']
      %1000 = vst [vmem:[#allocation40] sm:$0xff] %v170
      %s1001 = scalar_lea.vmem [#allocation40], 2
      %v1002 = vld [vmem:[%s1001] sm:$0x3]
      %v1003 = vunpack.c.0.f8e4m3b11 %v1002
      %v1004 = vunpack.c.1.f8e4m3b11 %v1002
      %v1005 = vunpack.c.2.f8e4m3b11 %v1002
      %v1006 = vunpack.c.3.f8e4m3b11 %v1002
      %v1007 = vand.u32 2147483647, %v1003
      %vm1008 = vcmp.gt.f32.partialorder %v1007, 29.0
      %vm1009 = vcmp.ne.f32.partialorder %v1003, %v1003
      %v1010 = vmul.f32 %v1003, 16.0
      %v1011 = vsel %vm1009, -0.0, %v1010
      %v1012 = vsel %vm1008, nan, %v1011
      %v1013 = vand.u32 2147483647, %v1004
      %vm1014 = vcmp.gt.f32.partialorder %v1013, 29.0
      %vm1015 = vcmp.ne.f32.partialorder %v1004, %v1004
      %v1016 = vmul.f32 %v1004, 16.0
      %v1017 = vsel %vm1015, -0.0, %v1016
      %v1018 = vsel %vm1014, nan, %v1017
      %v1019 = vand.u32 2147483647, %v1005
      %vm1020 = vcmp.gt.f32.partialorder %v1019, 29.0
      %vm1021 = vcmp.ne.f32.partialorder %v1005, %v1005
      %v1022 = vmul.f32 %v1005, 16.0
      %v1023 = vsel %vm1021, -0.0, %v1022
      %v1024 = vsel %vm1020, nan, %v1023
      %v1025 = vand.u32 2147483647, %v1006
      %vm1026 = vcmp.gt.f32.partialorder %v1025, 29.0
      %vm1027 = vcmp.ne.f32.partialorder %v1006, %v1006
      %v1028 = vmul.f32 %v1006, 16.0
      %v1029 = vsel %vm1027, -0.0, %v1028
      %v1030 = vsel %vm1026, nan, %v1029
    $region56: #{tpu_custom_call.1} parent=1
      #allocation41 [shape = 'u8[4096]{0}', space=vmem, size = 0x1000, scoped, tag = 'scoped memory for tpu_custom_call.1']
      %1031 = vst [vmem:[#allocation41] sm:$0xff] %v169
      %s1032 = scalar_lea.vmem [#allocation41], 4
      %v1033 = vld [vmem:[%s1032] sm:$0x3]
      %v1034 = vunpack.c.0.f8e4m3b11 %v1033
      %v1035 = vunpack.c.1.f8e4m3b11 %v1033
      %v1036 = vunpack.c.2.f8e4m3b11 %v1033
      %v1037 = vunpack.c.3.f8e4m3b11 %v1033
      %v1038 = vand.u32 2147483647, %v1034
      %vm1039 = vcmp.gt.f32.partialorder %v1038, 29.0
      %vm1040 = vcmp.ne.f32.partialorder %v1034, %v1034
      %v1041 = vmul.f32 %v1034, 16.0
      %v1042 = vsel %vm1040, -0.0, %v1041
      %v1043 = vsel %vm1039, nan, %v1042
      %v1044 = vand.u32 2147483647, %v1035
      %vm1045 = vcmp.gt.f32.partialorder %v1044, 29.0
      %vm1046 = vcmp.ne.f32.partialorder %v1035, %v1035
      %v1047 = vmul.f32 %v1035, 16.0
      %v1048 = vsel %vm1046, -0.0, %v1047
      %v1049 = vsel %vm1045, nan, %v1048
      %v1050 = vand.u32 2147483647, %v1036
      %vm1051 = vcmp.gt.f32.partialorder %v1050, 29.0
      %vm1052 = vcmp.ne.f32.partialorder %v1036, %v1036
      %v1053 = vmul.f32 %v1036, 16.0
      %v1054 = vsel %vm1052, -0.0, %v1053
      %v1055 = vsel %vm1051, nan, %v1054
      %v1056 = vand.u32 2147483647, %v1037
      %vm1057 = vcmp.gt.f32.partialorder %v1056, 29.0
      %vm1058 = vcmp.ne.f32.partialorder %v1037, %v1037
      %v1059 = vmul.f32 %v1037, 16.0
      %v1060 = vsel %vm1058, -0.0, %v1059
      %v1061 = vsel %vm1057, nan, %v1060
    $region57: #{tpu_custom_call.1} parent=1
      #allocation42 [shape = 'u8[4096]{0}', space=vmem, size = 0x1000, scoped, tag = 'scoped memory for tpu_custom_call.1']
      %1062 = vst [vmem:[#allocation42] sm:$0xff] %v170
      %s1063 = scalar_lea.vmem [#allocation42], 4
      %v1064 = vld [vmem:[%s1063] sm:$0x3]
      %v1065 = vunpack.c.0.f8e4m3b11 %v1064
      %v1066 = vunpack.c.1.f8e4m3b11 %v1064
      %v1067 = vunpack.c.2.f8e4m3b11 %v1064
      %v1068 = vunpack.c.3.f8e4m3b11 %v1064
      %v1069 = vand.u32 2147483647, %v1065
      %vm1070 = vcmp.gt.f32.partialorder %v1069, 29.0
      %vm1071 = vcmp.ne.f32.partialorder %v1065, %v1065
      %v1072 = vmul.f32 %v1065, 16.0
      %v1073 = vsel %vm1071, -0.0, %v1072
      %v1074 = vsel %vm1070, nan, %v1073
      %v1075 = vand.u32 2147483647, %v1066
      %vm1076 = vcmp.gt.f32.partialorder %v1075, 29.0
      %vm1077 = vcmp.ne.f32.partialorder %v1066, %v1066
      %v1078 = vmul.f32 %v1066, 16.0
      %v1079 = vsel %vm1077, -0.0, %v1078
      %v1080 = vsel %vm1076, nan, %v1079
      %v1081 = vand.u32 2147483647, %v1067
      %vm1082 = vcmp.gt.f32.partialorder %v1081, 29.0
      %vm1083 = vcmp.ne.f32.partialorder %v1067, %v1067
      %v1084 = vmul.f32 %v1067, 16.0
      %v1085 = vsel %vm1083, -0.0, %v1084
      %v1086 = vsel %vm1082, nan, %v1085
      %v1087 = vand.u32 2147483647, %v1068
      %vm1088 = vcmp.gt.f32.partialorder %v1087, 29.0
      %vm1089 = vcmp.ne.f32.partialorder %v1068, %v1068
      %v1090 = vmul.f32 %v1068, 16.0
      %v1091 = vsel %vm1089, -0.0, %v1090
      %v1092 = vsel %vm1088, nan, %v1091
    $region58: #{tpu_custom_call.1} parent=1
      #allocation43 [shape = 'u8[4096]{0}', space=vmem, size = 0x1000, scoped, tag = 'scoped memory for tpu_custom_call.1']
      %1093 = vst [vmem:[#allocation43] sm:$0xff] %v169
      %s1094 = scalar_lea.vmem [#allocation43], 6
      %v1095 = vld [vmem:[%s1094] sm:$0x3]
      %v1096 = vunpack.c.0.f8e4m3b11 %v1095
      %v1097 = vunpack.c.1.f8e4m3b11 %v1095
      %v1098 = vunpack.c.2.f8e4m3b11 %v1095
      %v1099 = vunpack.c.3.f8e4m3b11 %v1095
      %v1100 = vand.u32 2147483647, %v1096
      %vm1101 = vcmp.gt.f32.partialorder %v1100, 29.0
      %vm1102 = vcmp.ne.f32.partialorder %v1096, %v1096
      %v1103 = vmul.f32 %v1096, 16.0
      %v1104 = vsel %vm1102, -0.0, %v1103
      %v1105 = vsel %vm1101, nan, %v1104
      %v1106 = vand.u32 2147483647, %v1097
      %vm1107 = vcmp.gt.f32.partialorder %v1106, 29.0
      %vm1108 = vcmp.ne.f32.partialorder %v1097, %v1097
      %v1109 = vmul.f32 %v1097, 16.0
      %v1110 = vsel %vm1108, -0.0, %v1109
      %v1111 = vsel %vm1107, nan, %v1110
      %v1112 = vand.u32 2147483647, %v1098
      %vm1113 = vcmp.gt.f32.partialorder %v1112, 29.0
      %vm1114 = vcmp.ne.f32.partialorder %v1098, %v1098
      %v1115 = vmul.f32 %v1098, 16.0
      %v1116 = vsel %vm1114, -0.0, %v1115
      %v1117 = vsel %vm1113, nan, %v1116
      %v1118 = vand.u32 2147483647, %v1099
      %vm1119 = vcmp.gt.f32.partialorder %v1118, 29.0
      %vm1120 = vcmp.ne.f32.partialorder %v1099, %v1099
      %v1121 = vmul.f32 %v1099, 16.0
      %v1122 = vsel %vm1120, -0.0, %v1121
      %v1123 = vsel %vm1119, nan, %v1122
    $region59: #{tpu_custom_call.1} parent=1
      #allocation44 [shape = 'u8[4096]{0}', space=vmem, size = 0x1000, scoped, tag = 'scoped memory for tpu_custom_call.1']
      %1124 = vst [vmem:[#allocation44] sm:$0xff] %v170
      %s1125 = scalar_lea.vmem [#allocation44], 6
      %v1126 = vld [vmem:[%s1125] sm:$0x3]
      %v1127 = vunpack.c.0.f8e4m3b11 %v1126
      %v1128 = vunpack.c.1.f8e4m3b11 %v1126
      %v1129 = vunpack.c.2.f8e4m3b11 %v1126
      %v1130 = vunpack.c.3.f8e4m3b11 %v1126
      %v1131 = vand.u32 2147483647, %v1127
      %vm1132 = vcmp.gt.f32.partialorder %v1131, 29.0
      %vm1133 = vcmp.ne.f32.partialorder %v1127, %v1127
      %v1134 = vmul.f32 %v1127, 16.0
      %v1135 = vsel %vm1133, -0.0, %v1134
      %v1136 = vsel %vm1132, nan, %v1135
      %v1137 = vand.u32 2147483647, %v1128
      %vm1138 = vcmp.gt.f32.partialorder %v1137, 29.0
      %vm1139 = vcmp.ne.f32.partialorder %v1128, %v1128
      %v1140 = vmul.f32 %v1128, 16.0
      %v1141 = vsel %vm1139, -0.0, %v1140
      %v1142 = vsel %vm1138, nan, %v1141
      %v1143 = vand.u32 2147483647, %v1129
      %vm1144 = vcmp.gt.f32.partialorder %v1143, 29.0
      %vm1145 = vcmp.ne.f32.partialorder %v1129, %v1129
      %v1146 = vmul.f32 %v1129, 16.0
      %v1147 = vsel %vm1145, -0.0, %v1146
      %v1148 = vsel %vm1144, nan, %v1147
      %v1149 = vand.u32 2147483647, %v1130
      %vm1150 = vcmp.gt.f32.partialorder %v1149, 29.0
      %vm1151 = vcmp.ne.f32.partialorder %v1130, %v1130
      %v1152 = vmul.f32 %v1130, 16.0
      %v1153 = vsel %vm1151, -0.0, %v1152
      %v1154 = vsel %vm1150, nan, %v1153
    %v1155 = vpack.c.bf16 %v243, %v182
    %v1156 = vpack.c.bf16 %v274, %v212
    %v1157 = vpack.c.bf16 %v367, %v305
    %v1158 = vpack.c.bf16 %v398, %v336
    %v1159 = vpack.c.bf16 %v489, %v428
    %v1160 = vpack.c.bf16 %v520, %v458
    %v1161 = vpack.c.bf16 %v613, %v551
    %v1162 = vpack.c.bf16 %v644, %v582
    %v1163 = vpack.c.bf16 %v735, %v674
    %v1164 = vpack.c.bf16 %v766, %v704
    %v1165 = vpack.c.bf16 %v859, %v797
    %v1166 = vpack.c.bf16 %v890, %v828
    %v1167 = vpack.c.bf16 %v981, %v920
    %v1168 = vpack.c.bf16 %v1012, %v950
    %v1169 = vpack.c.bf16 %v1105, %v1043
    %v1170 = vpack.c.bf16 %v1136, %v1074
    %1171 = vmatpush.bf16.msra.mxu0 %v1169
    %1172 = vmatpush.bf16.msra.mxu0 %v1167
    %1173 = vmatpush.bf16.msra.mxu0 %v1165
    %1174 = vmatpush.bf16.msra.mxu0 %v1163
    %1175 = vmatpush.bf16.msra.mxu0 %v1161
    %1176 = vmatpush.bf16.msra.mxu0 %v1159
    %1177 = vmatpush.bf16.msra.mxu0 %v1157
    %1178 = vmatpush.bf16.msra.mxu0 %v1155
    %1179 = vmatmul.bf16.gmra.mxu0 %v158
    %v1180 = vpop.f32.mrf.mxu0
    %v1181 = vadd.f32 0.0, %v1180
    %v1182 = vpop.f32.mrf.mxu0
    %v1183 = vadd.f32 0.0, %v1182
    %1184 = vdwg.mxu0
    %1185 = vmatpush.bf16.msra.mxu0 %v1170
    %1186 = vmatpush.bf16.msra.mxu0 %v1168
    %1187 = vmatpush.bf16.msra.mxu0 %v1166
    %1188 = vmatpush.bf16.msra.mxu0 %v1164
    %1189 = vmatpush.bf16.msra.mxu0 %v1162
    %1190 = vmatpush.bf16.msra.mxu0 %v1160
    %1191 = vmatpush.bf16.msra.mxu0 %v1158
    %1192 = vmatpush.bf16.msra.mxu0 %v1156
    %1193 = vmatmul.bf16.gmra.mxu0 %v158
    %v1194 = vpop.f32.mrf.mxu0
    %v1195 = vadd.f32 0.0, %v1194
    %v1196 = vpop.f32.mrf.mxu0
    %v1197 = vadd.f32 0.0, %v1196
    %1198 = vdwg.mxu0
    %v1199 = vadd.f32 %v159, %v1181
    %v1200 = vadd.f32 %v160, %v1195
    %v1201 = vadd.f32 %v161, %v1183
    %v1202 = vadd.f32 %v162, %v1197
    %1203 = vst [vmem:[#allocation2] sm:$0xff] %v1199
    %1204 = vst [vmem:[#allocation2 + $0x8] sm:$0xff] %v1200
    %1205 = vst [vmem:[#allocation2 + $0x10] sm:$0xff] %v1201
    %1206 = vst [vmem:[#allocation2 + $0x18] sm:$0xff] %v1202
    // Predicated region
    $region60: #{tpu_custom_call.1} parent=1 // pred_check
      %p1207 = pneg %p56
    $region61: #{tpu_custom_call.1} parent=1 // pred_check_branch
      %1209 = sbr.rel (%p1207) target = $region63
    $region62: #{tpu_custom_call.1} parent=1 // pred_region
      %v1210 = vld [vmem:[#allocation2] sm:$0xff]
      %v1211 = vld [vmem:[#allocation2 + $0x8] sm:$0xff]
      %v1212 = vld [vmem:[#allocation2 + $0x10] sm:$0xff]
      %v1213 = vld [vmem:[#allocation2 + $0x18] sm:$0xff]
      %s1214 = sld [smem:[#allocation4 + $0x1]]
      %v1215 = vstv %s1214
      %v1216 = vmul.f32 %v1210, %v1215
      %v1217 = vmul.f32 %v1211, %v1215
      %v1218 = vmul.f32 %v1212, %v1215
      %v1219 = vmul.f32 %v1213, %v1215
      %v1220 = vpack.c.bf16 %v1217, %v1216
      %v1221 = vpack.c.bf16 %v1219, %v1218
      %v1222 = vld [vmem:[%s3] sm:$0x3]
      %1224 = vst [vmem:[#allocation1] ss:$9 sm:$0xff] %v1222
      %v1225 = vld [vmem:[#allocation1] sm:$0xff]
      %v1226 = vld [vmem:[#allocation1 + $0x9] sm:$0xff]
      %v1227 = vpack.i.b16 %v1225, %v1225
      %v1229 = vperm.slane %v1227, 0
      %v1230 = vpack.i.b16 %v1226, %v1226
      %v1232 = vperm.slane %v1230, 0
      %v1233 = vunpack.c.l.bf16 %v1220
      %v1234 = vunpack.c.h.bf16 %v1220
      %v1235 = vunpack.c.l.bf16 %v1221
      %v1236 = vunpack.c.h.bf16 %v1221
      %v1237 = vunpack.c.l.bf16 %v1229
      %v1238 = vunpack.c.l.bf16 %v1232
      %v1239 = vadd.f32 %v1233, %v1237
      %v1240 = vadd.f32 %v1234, %v1238
      %v1241 = vadd.f32 %v1235, %v1237
      %v1242 = vadd.f32 %v1236, %v1238
      %v1243 = vpack.c.bf16 %v1240, %v1239
      %v1244 = vpack.c.bf16 %v1242, %v1241
      %1245 = vst [vmem:[#allocation10] sm:$0xff] %v1243
      %1246 = vst [vmem:[#allocation10 + $0x8] sm:$0xff] %v1244
    $region63: #{tpu_custom_call.1} parent=1 // pred_fallthru
      _
    // Predicated region
    $region64: #{tpu_custom_call.1} parent=1 // pred_check
      _
    $region65: #{tpu_custom_call.1} parent=1 // pred_check_branch
      %1248 = sbr.rel (0) target = $region67
    $region66: #{tpu_custom_call.1} parent=1 // pred_region
      %1250 = vsyncadd [#allocation7], 0
      %s1251 = sshll.u32 [#allocation10], 4
      %s1252 = int_to_ptr.vmem [resolvable:$true] %s1251
      %s1253 = sshll.u32 %s4, 4
      %s1254 = int_to_ptr.hbm [resolvable:$true] %s1253
      %1259 = dma.vmem_to_hbm [thread:$0]  %s1252, 256, %s1254, [#allocation7], 128, 128, 8
    $region67: #{tpu_custom_call.1} parent=1 // pred_fallthru
      _
    // Predicated region
    $region68: #{tpu_custom_call.1} parent=1 // pred_check
      _
    $region69: #{tpu_custom_call.1} parent=1 // pred_check_branch
      %1261 = sbr.rel (0) target = $region71
    $region70: #{tpu_custom_call.1} parent=1 // pred_region
      %1263 = dma.done [#allocation7], 256
    $region71: #{tpu_custom_call.1} parent=1 // pred_fallthru
      _
    %1264 = vsyncpa [#allocation6], 1
    %1265 = vsyncpa [#allocation9], 1
    %1266 = vsyncpa [#allocation7], 1

</llo_original>
